<compile_context>
chip_gen: v7x
topology: tpu7x:2x2x1
jax: 0.10.0
libtpu: 0.0.40
codegen_flags: <defaults>
</compile_context>

<pallas_src>
import jax
import jax.numpy as jnp
from jax.experimental import pallas as pl
from jax.experimental.pallas import tpu as pltpu

# Model hyper-parameters (small, consistent with the module's structure;
# the original module uses EMBEDDING_SIZE=500 and a word2vec vocab).
WINDOW_SIZES = (1, 2, 3, 5)
NUM_FILTERS = 10              # F
EMBEDDING_SIZE = 128          # E  (lane-aligned small stand-in for 500)
VOCAB = 20                    # V
NUM_CLASSES = 5               # C
BATCH = 2                     # B
SEQ_LEN = 8                   # T

K = len(WINDOW_SIZES)
F = NUM_FILTERS
MAX_W = max(WINDOW_SIZES)
L_MAX = SEQ_LEN + MAX_W - 1   # longest conv output length (pad = w-1 both sides)
LANES = 128                   # lane-pad fused filter / class axes to a full vreg
NEG_MASK = -30.0              # pre-tanh mask value: never wins the max-pool


def cnn_kernel(ids_ref, table_ref, wf_ref, bm_ref, fcw_ref, fcb_ref,
               out_ref, emb_ref, gsem_ref):
    """Whole forward pass on one TensorCore.

    ids_ref  : (B*T,)   int32  token ids (SMEM, scalar-prefetched)
    table_ref: (V, E)   f32    embedding table (stays in HBM; rows DMA-gathered)
    wf_ref   : (E, MAX_W*128)  all conv taps, one 128-lane block per time offset
    bm_ref   : (L, 128) f32    conv bias, NEG_MASK past each window's length
    fcw_ref  : (128,128) f32   fused FC weight (zero rows/cols for padding)
    fcb_ref  : (1, 128) f32    FC bias (lane-padded)
    out_ref  : (B, 128) f32    lane-dense logits slab (first C lanes valid)
    emb_ref  : (B*T, E) f32    VMEM scratch for the gathered embeddings
    gsem_ref : (B*T,)   DMA semaphores, one per gathered row
    """
    n_tok, _ = emb_ref.shape
    b, lanes = out_ref.shape
    t = n_tok // b
    l_max = bm_ref.shape[0]
    max_w = l_max - t + 1

    # --- Embedding row gather: one small DMA per token (HBM -> VMEM). --------
    # Issue all copies back-to-back so they are in flight concurrently, then
    # wait on all of them. Each row is 128 lanes * 4 B = 512 B, lane-aligned.
    for i in range(n_tok):
        pltpu.make_async_copy(table_ref.at[pl.ds(ids_ref[i], 1), :],
                              emb_ref.at[pl.ds(i, 1), :],
                              gsem_ref.at[i]).start()
    for i in range(n_tok):
        pltpu.make_async_copy(table_ref.at[pl.ds(ids_ref[i], 1), :],
                              emb_ref.at[pl.ds(i, 1), :],
                              gsem_ref.at[i]).wait()

    emb = emb_ref[...]                                            # (B*T, E)

    # --- All conv taps of every window in ONE lane-dense MXU matmul. ---------
    # Offset block o occupies lanes [o*128,(o+1)*128); inside a block window k
    # sits at lanes [k*F,(k+1)*F) — same layout as the pooled features — so the
    # per-offset accumulates below are full-width, 128-lane-aligned adds.
    part = jnp.dot(emb, wf_ref[...], preferred_element_type=jnp.float32)
    part = part.reshape(b, t, max_w * lanes)                      # (B, T, 5*128)

    # --- Functional shifted accumulation implied by padding=(w-1, 0). --------
    # conv[b, tau, :] = sum_o part[b, tau - o, o-th 128-lane block]; realised
    # with one zero-extension concat + max_w lane-aligned static slices.
    # No VMEM scratch, no zero-fill stores, no read-modify-write.
    zpad = jnp.zeros((b, max_w - 1, max_w * lanes), jnp.float32)
    part_ext = jnp.concatenate([zpad, part, zpad], axis=1)        # (B, T+2*(w-1), 5*128)
    conv = part_ext[:, max_w - 1:max_w - 1 + l_max, 0:lanes]
    for o in range(1, max_w):
        s = max_w - 1 - o
        conv = conv + part_ext[:, s:s + l_max, o * lanes:(o + 1) * lanes]

    # --- bias(+length mask) -> max-pool over time -> tanh (hoisted: monotone,
    #     so tanh(max(x)) == max(tanh(x))) -> fused FC, all lane-dense. --------
    pooled = jnp.max(conv + bm_ref[...][None, :, :], axis=1)      # (B, 128)
    feat = jnp.tanh(pooled)                                       # B*128 elems on the EUP
    out_ref[...] = (jnp.dot(feat, fcw_ref[...],
                            preferred_element_type=jnp.float32)
                    + fcb_ref[...])


def pack_params(conv_ws, conv_bs, fcw_torch, fcb):
    """Host-side one-time packing of the module parameters for the kernel."""
    E = conv_ws[0].shape[1]
    C = fcw_torch.shape[0]

    # Fused conv weight (E, MAX_W*128): one 128-lane block per time offset o;
    # inside block o, window k's tap W[w-1-o] sits at lanes [k*F,(k+1)*F)
    # (zero for windows with w <= o).
    w_fused = jnp.zeros((E, MAX_W * LANES), jnp.float32)
    for o in range(MAX_W):
        for k, w in enumerate(WINDOW_SIZES):
            if w > o:
                c0 = o * LANES + k * F
                w_fused = w_fused.at[:, c0:c0 + F].set(conv_ws[k][w - 1 - o])

    # Conv bias per (time, lane); NEG_MASK past each window's true conv length
    # so the shared-length max-pool matches PyTorch's per-window max_pool1d.
    # (Safe: valid pre-tanh conv values are O(0.1) >> NEG_MASK.)
    bias_mask = jnp.zeros((L_MAX, LANES), jnp.float32)
    for k, w in enumerate(WINDOW_SIZES):
        lw = SEQ_LEN + w - 1
        c0 = k * F
        bias_mask = bias_mask.at[:lw, c0:c0 + F].set(conv_bs[k][None, :])
        bias_mask = bias_mask.at[lw:, c0:c0 + F].set(NEG_MASK)

    # Fused FC weight: rows follow the pooled window-major (k*F+f) layout,
    # matching PyTorch's filter-major flatten fcw_torch[c, f*K + k].
    fc_rows = fcw_torch.reshape(C, F, K).transpose(2, 1, 0).reshape(K * F, C)
    fc_fused = jnp.zeros((LANES, LANES), jnp.float32).at[:K * F, :C].set(fc_rows)
    fcb_pad = jnp.zeros((1, LANES), jnp.float32).at[:, :C].set(fcb)
    return w_fused, bias_mask, fc_fused, fcb_pad


def cnn_forward(x, emb_table, w_fused, bias_mask, fc_fused, fcb_pad, num_classes):
    B, T = x.shape
    n_tok = B * T
    ids = x.reshape(n_tok).astype(jnp.int32)
    out = pl.pallas_call(
        cnn_kernel,
        out_shape=jax.ShapeDtypeStruct((B, LANES), jnp.float32),
        grid_spec=pltpu.PrefetchScalarGridSpec(
            num_scalar_prefetch=1,                                 # ids -> SMEM
            grid=(1,),
            in_specs=[
                pl.BlockSpec(memory_space=pl.ANY),                 # embedding table stays in HBM
                pl.BlockSpec(memory_space=pltpu.MemorySpace.VMEM),  # fused conv weight
                pl.BlockSpec(memory_space=pltpu.MemorySpace.VMEM),  # conv bias / length mask
                pl.BlockSpec(memory_space=pltpu.MemorySpace.VMEM),  # fused FC weight
                pl.BlockSpec(memory_space=pltpu.MemorySpace.VMEM),  # FC bias
            ],
            out_specs=pl.BlockSpec(memory_space=pltpu.MemorySpace.VMEM),
            scratch_shapes=[
                pltpu.VMEM((n_tok, emb_table.shape[1]), jnp.float32),  # gathered embeddings
                pltpu.SemaphoreType.DMA((n_tok,)),                      # one sem per gather DMA
            ],
        ),
        compiler_params=pltpu.CompilerParams(
            dimension_semantics=("arbitrary",)),
        # TODO(synk): at larger batch, tile B over a ("parallel",) grid axis so a
        # v7x chip uses both TensorCores, sizing tiles against its 64 MiB VMEM.
    )(ids, emb_table.astype(jnp.float32), w_fused, bias_mask, fc_fused, fcb_pad)
    return out[:, :num_classes]


def reference_forward(x, emb_table, conv_ws, conv_bs, fcw_torch, fcb):
    """Pure-jnp replica of the PyTorch forward (for verification)."""
    emb = jnp.take(emb_table, x, axis=0)                          # (B, T, E)
    B, T, _ = emb.shape
    feats = []
    for k, w in enumerate(WINDOW_SIZES):
        W = conv_ws[k]                                            # (w, E, F)
        pad = w - 1
        padded = jnp.pad(emb, ((0, 0), (pad, pad), (0, 0)))
        L = T + w - 1
        conv = conv_bs[k][None, None, :]
        for dw in range(w):
            conv = conv + jnp.einsum('bte,ef->btf', padded[:, dw:dw + L, :], W[dw])
        feats.append(jnp.max(jnp.tanh(conv), axis=1))             # (B, F)
    feat = jnp.stack(feats, axis=-1).reshape(B, -1)               # (B, F*K) filter-major
    return feat @ fcw_torch.T + fcb[0]


if __name__ == "__main__":
    key = jax.random.PRNGKey(0)
    keys = jax.random.split(key, 5 + K)

    # Deterministic synthetic parameters (shapes implied by the module __init__).
    emb_table = jax.random.normal(keys[0], (VOCAB, EMBEDDING_SIZE), jnp.float32) * 0.1
    conv_ws = tuple(
        jax.random.normal(keys[1 + i], (w, EMBEDDING_SIZE, NUM_FILTERS), jnp.float32) * 0.1
        for i, w in enumerate(WINDOW_SIZES)
    )
    conv_bs = jax.random.normal(keys[1 + K], (K, NUM_FILTERS), jnp.float32) * 0.1
    # PyTorch nn.Linear weight is (C, F*K) over the filter-major flatten of (B, F, K).
    fcw_torch = jax.random.normal(keys[2 + K],
                                  (NUM_CLASSES, NUM_FILTERS * K), jnp.float32) * 0.1
    fcb = jax.random.normal(keys[3 + K], (1, NUM_CLASSES), jnp.float32) * 0.1

    # Deterministic input token ids.
    x = jax.random.randint(keys[4 + K], (BATCH, SEQ_LEN), 0, VOCAB, jnp.int32)

    w_fused, bias_mask, fc_fused, fcb_pad = pack_params(conv_ws, conv_bs, fcw_torch, fcb)
    logits = cnn_forward(x, emb_table, w_fused, bias_mask, fc_fused, fcb_pad, NUM_CLASSES)
    logits = jax.block_until_ready(logits)

    ref = reference_forward(x, emb_table, conv_ws, conv_bs, fcw_torch, fcb)
    assert logits.shape == (BATCH, NUM_CLASSES)
    assert jnp.allclose(logits, ref, atol=1e-4, rtol=1e-4), (logits, ref)

    print("KERNEL_OK")
</pallas_src>

<mosaic_0001>
module attributes {stable_mosaic.version = 11 : i64} {
  func.func @cnn_kernel(%arg0: i32, %arg1: memref<16xi32, #tpu.memory_space<smem>>, %arg2: memref<20x128xf32, #tpu.memory_space<any>>, %arg3: memref<128x640xf32, #tpu.memory_space<vmem>>, %arg4: memref<12x128xf32, #tpu.memory_space<vmem>>, %arg5: memref<128x128xf32, #tpu.memory_space<vmem>>, %arg6: memref<1x128xf32, #tpu.memory_space<vmem>>, %arg7: memref<2x128xf32, #tpu.memory_space<vmem>>, %arg8: memref<16x128xf32, #tpu.memory_space<vmem>>, %arg9: memref<16x!tpu.dma_semaphore, #tpu.memory_space<semaphore_mem>>) attributes {dimension_semantics = [#tpu.dimension_semantics<arbitrary>], iteration_bounds = array<i64: 1>, scalar_prefetch = 1 : i64, scratch_operands = 2 : i64, tpu.core_type = #tpu.core_type<tc>, window_params = [{}, {pipeline_mode = #tpu.pipeline_mode<synchronous>, transform_indices = @transform_1, window_bounds = array<i64: 128, 640>}, {pipeline_mode = #tpu.pipeline_mode<synchronous>, transform_indices = @transform_2, window_bounds = array<i64: 12, 128>}, {pipeline_mode = #tpu.pipeline_mode<synchronous>, transform_indices = @transform_3, window_bounds = array<i64: 128, 128>}, {pipeline_mode = #tpu.pipeline_mode<synchronous>, transform_indices = @transform_4, window_bounds = array<i64: 1, 128>}, {pipeline_mode = #tpu.pipeline_mode<synchronous>, transform_indices = @transform_5, window_bounds = array<i64: 2, 128>}]} {
    %c0 = arith.constant 0 : index
    %0 = memref.load %arg1[%c0] : memref<16xi32, #tpu.memory_space<smem>>
    %c0_i32 = arith.constant 0 : i32
    %c0_i32_0 = arith.constant 0 : i32
    %1 = tpu.memref_slice %arg2[%0, %c0_i32_0] : memref<20x128xf32, #tpu.memory_space<any>> -> memref<1x128xf32, #tpu.memory_space<any>>
    %c0_i32_1 = arith.constant 0 : i32
    %c0_i32_2 = arith.constant 0 : i32
    %2 = tpu.memref_slice %arg8[%c0_i32_1, %c0_i32_2] : memref<16x128xf32, #tpu.memory_space<vmem>> -> memref<1x128xf32, #tpu.memory_space<vmem>>
    %3 = tpu.memref_slice %arg9[%c0_i32] : memref<16x!tpu.dma_semaphore, #tpu.memory_space<semaphore_mem>> -> memref<1x!tpu.dma_semaphore, #tpu.memory_space<semaphore_mem>>
    %4 = tpu.memref_squeeze %3 : memref<1x!tpu.dma_semaphore, #tpu.memory_space<semaphore_mem>> -> memref<!tpu.dma_semaphore, #tpu.memory_space<semaphore_mem>>
    tpu.enqueue_dma source(%1 : memref<1x128xf32, #tpu.memory_space<any>>) target(%2 : memref<1x128xf32, #tpu.memory_space<vmem>>) target_semaphore(%4 : memref<!tpu.dma_semaphore, #tpu.memory_space<semaphore_mem>>)
    %c1 = arith.constant 1 : index
    %5 = memref.load %arg1[%c1] : memref<16xi32, #tpu.memory_space<smem>>
    %c1_i32 = arith.constant 1 : i32
    %c0_i32_3 = arith.constant 0 : i32
    %6 = tpu.memref_slice %arg2[%5, %c0_i32_3] : memref<20x128xf32, #tpu.memory_space<any>> -> memref<1x128xf32, #tpu.memory_space<any>>
    %c1_i32_4 = arith.constant 1 : i32
    %c0_i32_5 = arith.constant 0 : i32
    %7 = tpu.memref_slice %arg8[%c1_i32_4, %c0_i32_5] : memref<16x128xf32, #tpu.memory_space<vmem>> -> memref<1x128xf32, #tpu.memory_space<vmem>>
    %8 = tpu.memref_slice %arg9[%c1_i32] : memref<16x!tpu.dma_semaphore, #tpu.memory_space<semaphore_mem>> -> memref<1x!tpu.dma_semaphore, #tpu.memory_space<semaphore_mem>>
    %9 = tpu.memref_squeeze %8 : memref<1x!tpu.dma_semaphore, #tpu.memory_space<semaphore_mem>> -> memref<!tpu.dma_semaphore, #tpu.memory_space<semaphore_mem>>
    tpu.enqueue_dma source(%6 : memref<1x128xf32, #tpu.memory_space<any>>) target(%7 : memref<1x128xf32, #tpu.memory_space<vmem>>) target_semaphore(%9 : memref<!tpu.dma_semaphore, #tpu.memory_space<semaphore_mem>>)
    %c2 = arith.constant 2 : index
    %10 = memref.load %arg1[%c2] : memref<16xi32, #tpu.memory_space<smem>>
    %c2_i32 = arith.constant 2 : i32
    %c0_i32_6 = arith.constant 0 : i32
    %11 = tpu.memref_slice %arg2[%10, %c0_i32_6] : memref<20x128xf32, #tpu.memory_space<any>> -> memref<1x128xf32, #tpu.memory_space<any>>
    %c2_i32_7 = arith.constant 2 : i32
    %c0_i32_8 = arith.constant 0 : i32
    %12 = tpu.memref_slice %arg8[%c2_i32_7, %c0_i32_8] : memref<16x128xf32, #tpu.memory_space<vmem>> -> memref<1x128xf32, #tpu.memory_space<vmem>>
    %13 = tpu.memref_slice %arg9[%c2_i32] : memref<16x!tpu.dma_semaphore, #tpu.memory_space<semaphore_mem>> -> memref<1x!tpu.dma_semaphore, #tpu.memory_space<semaphore_mem>>
    %14 = tpu.memref_squeeze %13 : memref<1x!tpu.dma_semaphore, #tpu.memory_space<semaphore_mem>> -> memref<!tpu.dma_semaphore, #tpu.memory_space<semaphore_mem>>
    tpu.enqueue_dma source(%11 : memref<1x128xf32, #tpu.memory_space<any>>) target(%12 : memref<1x128xf32, #tpu.memory_space<vmem>>) target_semaphore(%14 : memref<!tpu.dma_semaphore, #tpu.memory_space<semaphore_mem>>)
    %c3 = arith.constant 3 : index
    %15 = memref.load %arg1[%c3] : memref<16xi32, #tpu.memory_space<smem>>
    %c3_i32 = arith.constant 3 : i32
    %c0_i32_9 = arith.constant 0 : i32
    %16 = tpu.memref_slice %arg2[%15, %c0_i32_9] : memref<20x128xf32, #tpu.memory_space<any>> -> memref<1x128xf32, #tpu.memory_space<any>>
    %c3_i32_10 = arith.constant 3 : i32
    %c0_i32_11 = arith.constant 0 : i32
    %17 = tpu.memref_slice %arg8[%c3_i32_10, %c0_i32_11] : memref<16x128xf32, #tpu.memory_space<vmem>> -> memref<1x128xf32, #tpu.memory_space<vmem>>
    %18 = tpu.memref_slice %arg9[%c3_i32] : memref<16x!tpu.dma_semaphore, #tpu.memory_space<semaphore_mem>> -> memref<1x!tpu.dma_semaphore, #tpu.memory_space<semaphore_mem>>
    %19 = tpu.memref_squeeze %18 : memref<1x!tpu.dma_semaphore, #tpu.memory_space<semaphore_mem>> -> memref<!tpu.dma_semaphore, #tpu.memory_space<semaphore_mem>>
    tpu.enqueue_dma source(%16 : memref<1x128xf32, #tpu.memory_space<any>>) target(%17 : memref<1x128xf32, #tpu.memory_space<vmem>>) target_semaphore(%19 : memref<!tpu.dma_semaphore, #tpu.memory_space<semaphore_mem>>)
    %c4 = arith.constant 4 : index
    %20 = memref.load %arg1[%c4] : memref<16xi32, #tpu.memory_space<smem>>
    %c4_i32 = arith.constant 4 : i32
    %c0_i32_12 = arith.constant 0 : i32
    %21 = tpu.memref_slice %arg2[%20, %c0_i32_12] : memref<20x128xf32, #tpu.memory_space<any>> -> memref<1x128xf32, #tpu.memory_space<any>>
    %c4_i32_13 = arith.constant 4 : i32
    %c0_i32_14 = arith.constant 0 : i32
    %22 = tpu.memref_slice %arg8[%c4_i32_13, %c0_i32_14] : memref<16x128xf32, #tpu.memory_space<vmem>> -> memref<1x128xf32, #tpu.memory_space<vmem>>
    %23 = tpu.memref_slice %arg9[%c4_i32] : memref<16x!tpu.dma_semaphore, #tpu.memory_space<semaphore_mem>> -> memref<1x!tpu.dma_semaphore, #tpu.memory_space<semaphore_mem>>
    %24 = tpu.memref_squeeze %23 : memref<1x!tpu.dma_semaphore, #tpu.memory_space<semaphore_mem>> -> memref<!tpu.dma_semaphore, #tpu.memory_space<semaphore_mem>>
    tpu.enqueue_dma source(%21 : memref<1x128xf32, #tpu.memory_space<any>>) target(%22 : memref<1x128xf32, #tpu.memory_space<vmem>>) target_semaphore(%24 : memref<!tpu.dma_semaphore, #tpu.memory_space<semaphore_mem>>)
    %c5 = arith.constant 5 : index
    %25 = memref.load %arg1[%c5] : memref<16xi32, #tpu.memory_space<smem>>
    %c5_i32 = arith.constant 5 : i32
    %c0_i32_15 = arith.constant 0 : i32
    %26 = tpu.memref_slice %arg2[%25, %c0_i32_15] : memref<20x128xf32, #tpu.memory_space<any>> -> memref<1x128xf32, #tpu.memory_space<any>>
    %c5_i32_16 = arith.constant 5 : i32
    %c0_i32_17 = arith.constant 0 : i32
    %27 = tpu.memref_slice %arg8[%c5_i32_16, %c0_i32_17] : memref<16x128xf32, #tpu.memory_space<vmem>> -> memref<1x128xf32, #tpu.memory_space<vmem>>
    %28 = tpu.memref_slice %arg9[%c5_i32] : memref<16x!tpu.dma_semaphore, #tpu.memory_space<semaphore_mem>> -> memref<1x!tpu.dma_semaphore, #tpu.memory_space<semaphore_mem>>
    %29 = tpu.memref_squeeze %28 : memref<1x!tpu.dma_semaphore, #tpu.memory_space<semaphore_mem>> -> memref<!tpu.dma_semaphore, #tpu.memory_space<semaphore_mem>>
    tpu.enqueue_dma source(%26 : memref<1x128xf32, #tpu.memory_space<any>>) target(%27 : memref<1x128xf32, #tpu.memory_space<vmem>>) target_semaphore(%29 : memref<!tpu.dma_semaphore, #tpu.memory_space<semaphore_mem>>)
    %c6 = arith.constant 6 : index
    %30 = memref.load %arg1[%c6] : memref<16xi32, #tpu.memory_space<smem>>
    %c6_i32 = arith.constant 6 : i32
    %c0_i32_18 = arith.constant 0 : i32
    %31 = tpu.memref_slice %arg2[%30, %c0_i32_18] : memref<20x128xf32, #tpu.memory_space<any>> -> memref<1x128xf32, #tpu.memory_space<any>>
    %c6_i32_19 = arith.constant 6 : i32
    %c0_i32_20 = arith.constant 0 : i32
    %32 = tpu.memref_slice %arg8[%c6_i32_19, %c0_i32_20] : memref<16x128xf32, #tpu.memory_space<vmem>> -> memref<1x128xf32, #tpu.memory_space<vmem>>
    %33 = tpu.memref_slice %arg9[%c6_i32] : memref<16x!tpu.dma_semaphore, #tpu.memory_space<semaphore_mem>> -> memref<1x!tpu.dma_semaphore, #tpu.memory_space<semaphore_mem>>
    %34 = tpu.memref_squeeze %33 : memref<1x!tpu.dma_semaphore, #tpu.memory_space<semaphore_mem>> -> memref<!tpu.dma_semaphore, #tpu.memory_space<semaphore_mem>>
    tpu.enqueue_dma source(%31 : memref<1x128xf32, #tpu.memory_space<any>>) target(%32 : memref<1x128xf32, #tpu.memory_space<vmem>>) target_semaphore(%34 : memref<!tpu.dma_semaphore, #tpu.memory_space<semaphore_mem>>)
    %c7 = arith.constant 7 : index
    %35 = memref.load %arg1[%c7] : memref<16xi32, #tpu.memory_space<smem>>
    %c7_i32 = arith.constant 7 : i32
    %c0_i32_21 = arith.constant 0 : i32
    %36 = tpu.memref_slice %arg2[%35, %c0_i32_21] : memref<20x128xf32, #tpu.memory_space<any>> -> memref<1x128xf32, #tpu.memory_space<any>>
    %c7_i32_22 = arith.constant 7 : i32
    %c0_i32_23 = arith.constant 0 : i32
    %37 = tpu.memref_slice %arg8[%c7_i32_22, %c0_i32_23] : memref<16x128xf32, #tpu.memory_space<vmem>> -> memref<1x128xf32, #tpu.memory_space<vmem>>
    %38 = tpu.memref_slice %arg9[%c7_i32] : memref<16x!tpu.dma_semaphore, #tpu.memory_space<semaphore_mem>> -> memref<1x!tpu.dma_semaphore, #tpu.memory_space<semaphore_mem>>
    %39 = tpu.memref_squeeze %38 : memref<1x!tpu.dma_semaphore, #tpu.memory_space<semaphore_mem>> -> memref<!tpu.dma_semaphore, #tpu.memory_space<semaphore_mem>>
    tpu.enqueue_dma source(%36 : memref<1x128xf32, #tpu.memory_space<any>>) target(%37 : memref<1x128xf32, #tpu.memory_space<vmem>>) target_semaphore(%39 : memref<!tpu.dma_semaphore, #tpu.memory_space<semaphore_mem>>)
    %c8 = arith.constant 8 : index
    %40 = memref.load %arg1[%c8] : memref<16xi32, #tpu.memory_space<smem>>
    %c8_i32 = arith.constant 8 : i32
    %c0_i32_24 = arith.constant 0 : i32
    %41 = tpu.memref_slice %arg2[%40, %c0_i32_24] : memref<20x128xf32, #tpu.memory_space<any>> -> memref<1x128xf32, #tpu.memory_space<any>>
    %c8_i32_25 = arith.constant 8 : i32
    %c0_i32_26 = arith.constant 0 : i32
    %42 = tpu.memref_slice %arg8[%c8_i32_25, %c0_i32_26] : memref<16x128xf32, #tpu.memory_space<vmem>> -> memref<1x128xf32, #tpu.memory_space<vmem>>
    %43 = tpu.memref_slice %arg9[%c8_i32] : memref<16x!tpu.dma_semaphore, #tpu.memory_space<semaphore_mem>> -> memref<1x!tpu.dma_semaphore, #tpu.memory_space<semaphore_mem>>
    %44 = tpu.memref_squeeze %43 : memref<1x!tpu.dma_semaphore, #tpu.memory_space<semaphore_mem>> -> memref<!tpu.dma_semaphore, #tpu.memory_space<semaphore_mem>>
    tpu.enqueue_dma source(%41 : memref<1x128xf32, #tpu.memory_space<any>>) target(%42 : memref<1x128xf32, #tpu.memory_space<vmem>>) target_semaphore(%44 : memref<!tpu.dma_semaphore, #tpu.memory_space<semaphore_mem>>)
    %c9 = arith.constant 9 : index
    %45 = memref.load %arg1[%c9] : memref<16xi32, #tpu.memory_space<smem>>
    %c9_i32 = arith.constant 9 : i32
    %c0_i32_27 = arith.constant 0 : i32
    %46 = tpu.memref_slice %arg2[%45, %c0_i32_27] : memref<20x128xf32, #tpu.memory_space<any>> -> memref<1x128xf32, #tpu.memory_space<any>>
    %c9_i32_28 = arith.constant 9 : i32
    %c0_i32_29 = arith.constant 0 : i32
    %47 = tpu.memref_slice %arg8[%c9_i32_28, %c0_i32_29] : memref<16x128xf32, #tpu.memory_space<vmem>> -> memref<1x128xf32, #tpu.memory_space<vmem>>
    %48 = tpu.memref_slice %arg9[%c9_i32] : memref<16x!tpu.dma_semaphore, #tpu.memory_space<semaphore_mem>> -> memref<1x!tpu.dma_semaphore, #tpu.memory_space<semaphore_mem>>
    %49 = tpu.memref_squeeze %48 : memref<1x!tpu.dma_semaphore, #tpu.memory_space<semaphore_mem>> -> memref<!tpu.dma_semaphore, #tpu.memory_space<semaphore_mem>>
    tpu.enqueue_dma source(%46 : memref<1x128xf32, #tpu.memory_space<any>>) target(%47 : memref<1x128xf32, #tpu.memory_space<vmem>>) target_semaphore(%49 : memref<!tpu.dma_semaphore, #tpu.memory_space<semaphore_mem>>)
    %c10 = arith.constant 10 : index
    %50 = memref.load %arg1[%c10] : memref<16xi32, #tpu.memory_space<smem>>
    %c10_i32 = arith.constant 10 : i32
    %c0_i32_30 = arith.constant 0 : i32
    %51 = tpu.memref_slice %arg2[%50, %c0_i32_30] : memref<20x128xf32, #tpu.memory_space<any>> -> memref<1x128xf32, #tpu.memory_space<any>>
    %c10_i32_31 = arith.constant 10 : i32
    %c0_i32_32 = arith.constant 0 : i32
    %52 = tpu.memref_slice %arg8[%c10_i32_31, %c0_i32_32] : memref<16x128xf32, #tpu.memory_space<vmem>> -> memref<1x128xf32, #tpu.memory_space<vmem>>
    %53 = tpu.memref_slice %arg9[%c10_i32] : memref<16x!tpu.dma_semaphore, #tpu.memory_space<semaphore_mem>> -> memref<1x!tpu.dma_semaphore, #tpu.memory_space<semaphore_mem>>
    %54 = tpu.memref_squeeze %53 : memref<1x!tpu.dma_semaphore, #tpu.memory_space<semaphore_mem>> -> memref<!tpu.dma_semaphore, #tpu.memory_space<semaphore_mem>>
    tpu.enqueue_dma source(%51 : memref<1x128xf32, #tpu.memory_space<any>>) target(%52 : memref<1x128xf32, #tpu.memory_space<vmem>>) target_semaphore(%54 : memref<!tpu.dma_semaphore, #tpu.memory_space<semaphore_mem>>)
    %c11 = arith.constant 11 : index
    %55 = memref.load %arg1[%c11] : memref<16xi32, #tpu.memory_space<smem>>
    %c11_i32 = arith.constant 11 : i32
    %c0_i32_33 = arith.constant 0 : i32
    %56 = tpu.memref_slice %arg2[%55, %c0_i32_33] : memref<20x128xf32, #tpu.memory_space<any>> -> memref<1x128xf32, #tpu.memory_space<any>>
    %c11_i32_34 = arith.constant 11 : i32
    %c0_i32_35 = arith.constant 0 : i32
    %57 = tpu.memref_slice %arg8[%c11_i32_34, %c0_i32_35] : memref<16x128xf32, #tpu.memory_space<vmem>> -> memref<1x128xf32, #tpu.memory_space<vmem>>
    %58 = tpu.memref_slice %arg9[%c11_i32] : memref<16x!tpu.dma_semaphore, #tpu.memory_space<semaphore_mem>> -> memref<1x!tpu.dma_semaphore, #tpu.memory_space<semaphore_mem>>
    %59 = tpu.memref_squeeze %58 : memref<1x!tpu.dma_semaphore, #tpu.memory_space<semaphore_mem>> -> memref<!tpu.dma_semaphore, #tpu.memory_space<semaphore_mem>>
    tpu.enqueue_dma source(%56 : memref<1x128xf32, #tpu.memory_space<any>>) target(%57 : memref<1x128xf32, #tpu.memory_space<vmem>>) target_semaphore(%59 : memref<!tpu.dma_semaphore, #tpu.memory_space<semaphore_mem>>)
    %c12 = arith.constant 12 : index
    %60 = memref.load %arg1[%c12] : memref<16xi32, #tpu.memory_space<smem>>
    %c12_i32 = arith.constant 12 : i32
    %c0_i32_36 = arith.constant 0 : i32
    %61 = tpu.memref_slice %arg2[%60, %c0_i32_36] : memref<20x128xf32, #tpu.memory_space<any>> -> memref<1x128xf32, #tpu.memory_space<any>>
    %c12_i32_37 = arith.constant 12 : i32
    %c0_i32_38 = arith.constant 0 : i32
    %62 = tpu.memref_slice %arg8[%c12_i32_37, %c0_i32_38] : memref<16x128xf32, #tpu.memory_space<vmem>> -> memref<1x128xf32, #tpu.memory_space<vmem>>
    %63 = tpu.memref_slice %arg9[%c12_i32] : memref<16x!tpu.dma_semaphore, #tpu.memory_space<semaphore_mem>> -> memref<1x!tpu.dma_semaphore, #tpu.memory_space<semaphore_mem>>
    %64 = tpu.memref_squeeze %63 : memref<1x!tpu.dma_semaphore, #tpu.memory_space<semaphore_mem>> -> memref<!tpu.dma_semaphore, #tpu.memory_space<semaphore_mem>>
    tpu.enqueue_dma source(%61 : memref<1x128xf32, #tpu.memory_space<any>>) target(%62 : memref<1x128xf32, #tpu.memory_space<vmem>>) target_semaphore(%64 : memref<!tpu.dma_semaphore, #tpu.memory_space<semaphore_mem>>)
    %c13 = arith.constant 13 : index
    %65 = memref.load %arg1[%c13] : memref<16xi32, #tpu.memory_space<smem>>
    %c13_i32 = arith.constant 13 : i32
    %c0_i32_39 = arith.constant 0 : i32
    %66 = tpu.memref_slice %arg2[%65, %c0_i32_39] : memref<20x128xf32, #tpu.memory_space<any>> -> memref<1x128xf32, #tpu.memory_space<any>>
    %c13_i32_40 = arith.constant 13 : i32
    %c0_i32_41 = arith.constant 0 : i32
    %67 = tpu.memref_slice %arg8[%c13_i32_40, %c0_i32_41] : memref<16x128xf32, #tpu.memory_space<vmem>> -> memref<1x128xf32, #tpu.memory_space<vmem>>
    %68 = tpu.memref_slice %arg9[%c13_i32] : memref<16x!tpu.dma_semaphore, #tpu.memory_space<semaphore_mem>> -> memref<1x!tpu.dma_semaphore, #tpu.memory_space<semaphore_mem>>
    %69 = tpu.memref_squeeze %68 : memref<1x!tpu.dma_semaphore, #tpu.memory_space<semaphore_mem>> -> memref<!tpu.dma_semaphore, #tpu.memory_space<semaphore_mem>>
    tpu.enqueue_dma source(%66 : memref<1x128xf32, #tpu.memory_space<any>>) target(%67 : memref<1x128xf32, #tpu.memory_space<vmem>>) target_semaphore(%69 : memref<!tpu.dma_semaphore, #tpu.memory_space<semaphore_mem>>)
    %c14 = arith.constant 14 : index
    %70 = memref.load %arg1[%c14] : memref<16xi32, #tpu.memory_space<smem>>
    %c14_i32 = arith.constant 14 : i32
    %c0_i32_42 = arith.constant 0 : i32
    %71 = tpu.memref_slice %arg2[%70, %c0_i32_42] : memref<20x128xf32, #tpu.memory_space<any>> -> memref<1x128xf32, #tpu.memory_space<any>>
    %c14_i32_43 = arith.constant 14 : i32
    %c0_i32_44 = arith.constant 0 : i32
    %72 = tpu.memref_slice %arg8[%c14_i32_43, %c0_i32_44] : memref<16x128xf32, #tpu.memory_space<vmem>> -> memref<1x128xf32, #tpu.memory_space<vmem>>
    %73 = tpu.memref_slice %arg9[%c14_i32] : memref<16x!tpu.dma_semaphore, #tpu.memory_space<semaphore_mem>> -> memref<1x!tpu.dma_semaphore, #tpu.memory_space<semaphore_mem>>
    %74 = tpu.memref_squeeze %73 : memref<1x!tpu.dma_semaphore, #tpu.memory_space<semaphore_mem>> -> memref<!tpu.dma_semaphore, #tpu.memory_space<semaphore_mem>>
    tpu.enqueue_dma source(%71 : memref<1x128xf32, #tpu.memory_space<any>>) target(%72 : memref<1x128xf32, #tpu.memory_space<vmem>>) target_semaphore(%74 : memref<!tpu.dma_semaphore, #tpu.memory_space<semaphore_mem>>)
    %c15 = arith.constant 15 : index
    %75 = memref.load %arg1[%c15] : memref<16xi32, #tpu.memory_space<smem>>
    %c15_i32 = arith.constant 15 : i32
    %c0_i32_45 = arith.constant 0 : i32
    %76 = tpu.memref_slice %arg2[%75, %c0_i32_45] : memref<20x128xf32, #tpu.memory_space<any>> -> memref<1x128xf32, #tpu.memory_space<any>>
    %c15_i32_46 = arith.constant 15 : i32
    %c0_i32_47 = arith.constant 0 : i32
    %77 = tpu.memref_slice %arg8[%c15_i32_46, %c0_i32_47] : memref<16x128xf32, #tpu.memory_space<vmem>> -> memref<1x128xf32, #tpu.memory_space<vmem>>
    %78 = tpu.memref_slice %arg9[%c15_i32] : memref<16x!tpu.dma_semaphore, #tpu.memory_space<semaphore_mem>> -> memref<1x!tpu.dma_semaphore, #tpu.memory_space<semaphore_mem>>
    %79 = tpu.memref_squeeze %78 : memref<1x!tpu.dma_semaphore, #tpu.memory_space<semaphore_mem>> -> memref<!tpu.dma_semaphore, #tpu.memory_space<semaphore_mem>>
    tpu.enqueue_dma source(%76 : memref<1x128xf32, #tpu.memory_space<any>>) target(%77 : memref<1x128xf32, #tpu.memory_space<vmem>>) target_semaphore(%79 : memref<!tpu.dma_semaphore, #tpu.memory_space<semaphore_mem>>)
    %c0_48 = arith.constant 0 : index
    %80 = memref.load %arg1[%c0_48] : memref<16xi32, #tpu.memory_space<smem>>
    %c0_i32_49 = arith.constant 0 : i32
    %c0_i32_50 = arith.constant 0 : i32
    %81 = tpu.memref_slice %arg2[%80, %c0_i32_50] : memref<20x128xf32, #tpu.memory_space<any>> -> memref<1x128xf32, #tpu.memory_space<any>>
    %c0_i32_51 = arith.constant 0 : i32
    %c0_i32_52 = arith.constant 0 : i32
    %82 = tpu.memref_slice %arg8[%c0_i32_51, %c0_i32_52] : memref<16x128xf32, #tpu.memory_space<vmem>> -> memref<1x128xf32, #tpu.memory_space<vmem>>
    %83 = tpu.memref_slice %arg9[%c0_i32_49] : memref<16x!tpu.dma_semaphore, #tpu.memory_space<semaphore_mem>> -> memref<1x!tpu.dma_semaphore, #tpu.memory_space<semaphore_mem>>
    %84 = tpu.memref_squeeze %83 : memref<1x!tpu.dma_semaphore, #tpu.memory_space<semaphore_mem>> -> memref<!tpu.dma_semaphore, #tpu.memory_space<semaphore_mem>>
    tpu.wait_dma2 semaphore(%84 : memref<!tpu.dma_semaphore, #tpu.memory_space<semaphore_mem>>) src(%81 : memref<1x128xf32, #tpu.memory_space<any>>) dst(%82 : memref<1x128xf32, #tpu.memory_space<vmem>>)
    %c1_53 = arith.constant 1 : index
    %85 = memref.load %arg1[%c1_53] : memref<16xi32, #tpu.memory_space<smem>>
    %c1_i32_54 = arith.constant 1 : i32
    %c0_i32_55 = arith.constant 0 : i32
    %86 = tpu.memref_slice %arg2[%85, %c0_i32_55] : memref<20x128xf32, #tpu.memory_space<any>> -> memref<1x128xf32, #tpu.memory_space<any>>
    %c1_i32_56 = arith.constant 1 : i32
    %c0_i32_57 = arith.constant 0 : i32
    %87 = tpu.memref_slice %arg8[%c1_i32_56, %c0_i32_57] : memref<16x128xf32, #tpu.memory_space<vmem>> -> memref<1x128xf32, #tpu.memory_space<vmem>>
    %88 = tpu.memref_slice %arg9[%c1_i32_54] : memref<16x!tpu.dma_semaphore, #tpu.memory_space<semaphore_mem>> -> memref<1x!tpu.dma_semaphore, #tpu.memory_space<semaphore_mem>>
    %89 = tpu.memref_squeeze %88 : memref<1x!tpu.dma_semaphore, #tpu.memory_space<semaphore_mem>> -> memref<!tpu.dma_semaphore, #tpu.memory_space<semaphore_mem>>
    tpu.wait_dma2 semaphore(%89 : memref<!tpu.dma_semaphore, #tpu.memory_space<semaphore_mem>>) src(%86 : memref<1x128xf32, #tpu.memory_space<any>>) dst(%87 : memref<1x128xf32, #tpu.memory_space<vmem>>)
    %c2_58 = arith.constant 2 : index
    %90 = memref.load %arg1[%c2_58] : memref<16xi32, #tpu.memory_space<smem>>
    %c2_i32_59 = arith.constant 2 : i32
    %c0_i32_60 = arith.constant 0 : i32
    %91 = tpu.memref_slice %arg2[%90, %c0_i32_60] : memref<20x128xf32, #tpu.memory_space<any>> -> memref<1x128xf32, #tpu.memory_space<any>>
    %c2_i32_61 = arith.constant 2 : i32
    %c0_i32_62 = arith.constant 0 : i32
    %92 = tpu.memref_slice %arg8[%c2_i32_61, %c0_i32_62] : memref<16x128xf32, #tpu.memory_space<vmem>> -> memref<1x128xf32, #tpu.memory_space<vmem>>
    %93 = tpu.memref_slice %arg9[%c2_i32_59] : memref<16x!tpu.dma_semaphore, #tpu.memory_space<semaphore_mem>> -> memref<1x!tpu.dma_semaphore, #tpu.memory_space<semaphore_mem>>
    %94 = tpu.memref_squeeze %93 : memref<1x!tpu.dma_semaphore, #tpu.memory_space<semaphore_mem>> -> memref<!tpu.dma_semaphore, #tpu.memory_space<semaphore_mem>>
    tpu.wait_dma2 semaphore(%94 : memref<!tpu.dma_semaphore, #tpu.memory_space<semaphore_mem>>) src(%91 : memref<1x128xf32, #tpu.memory_space<any>>) dst(%92 : memref<1x128xf32, #tpu.memory_space<vmem>>)
    %c3_63 = arith.constant 3 : index
    %95 = memref.load %arg1[%c3_63] : memref<16xi32, #tpu.memory_space<smem>>
    %c3_i32_64 = arith.constant 3 : i32
    %c0_i32_65 = arith.constant 0 : i32
    %96 = tpu.memref_slice %arg2[%95, %c0_i32_65] : memref<20x128xf32, #tpu.memory_space<any>> -> memref<1x128xf32, #tpu.memory_space<any>>
    %c3_i32_66 = arith.constant 3 : i32
    %c0_i32_67 = arith.constant 0 : i32
    %97 = tpu.memref_slice %arg8[%c3_i32_66, %c0_i32_67] : memref<16x128xf32, #tpu.memory_space<vmem>> -> memref<1x128xf32, #tpu.memory_space<vmem>>
    %98 = tpu.memref_slice %arg9[%c3_i32_64] : memref<16x!tpu.dma_semaphore, #tpu.memory_space<semaphore_mem>> -> memref<1x!tpu.dma_semaphore, #tpu.memory_space<semaphore_mem>>
    %99 = tpu.memref_squeeze %98 : memref<1x!tpu.dma_semaphore, #tpu.memory_space<semaphore_mem>> -> memref<!tpu.dma_semaphore, #tpu.memory_space<semaphore_mem>>
    tpu.wait_dma2 semaphore(%99 : memref<!tpu.dma_semaphore, #tpu.memory_space<semaphore_mem>>) src(%96 : memref<1x128xf32, #tpu.memory_space<any>>) dst(%97 : memref<1x128xf32, #tpu.memory_space<vmem>>)
    %c4_68 = arith.constant 4 : index
    %100 = memref.load %arg1[%c4_68] : memref<16xi32, #tpu.memory_space<smem>>
    %c4_i32_69 = arith.constant 4 : i32
    %c0_i32_70 = arith.constant 0 : i32
    %101 = tpu.memref_slice %arg2[%100, %c0_i32_70] : memref<20x128xf32, #tpu.memory_space<any>> -> memref<1x128xf32, #tpu.memory_space<any>>
    %c4_i32_71 = arith.constant 4 : i32
    %c0_i32_72 = arith.constant 0 : i32
    %102 = tpu.memref_slice %arg8[%c4_i32_71, %c0_i32_72] : memref<16x128xf32, #tpu.memory_space<vmem>> -> memref<1x128xf32, #tpu.memory_space<vmem>>
    %103 = tpu.memref_slice %arg9[%c4_i32_69] : memref<16x!tpu.dma_semaphore, #tpu.memory_space<semaphore_mem>> -> memref<1x!tpu.dma_semaphore, #tpu.memory_space<semaphore_mem>>
    %104 = tpu.memref_squeeze %103 : memref<1x!tpu.dma_semaphore, #tpu.memory_space<semaphore_mem>> -> memref<!tpu.dma_semaphore, #tpu.memory_space<semaphore_mem>>
    tpu.wait_dma2 semaphore(%104 : memref<!tpu.dma_semaphore, #tpu.memory_space<semaphore_mem>>) src(%101 : memref<1x128xf32, #tpu.memory_space<any>>) dst(%102 : memref<1x128xf32, #tpu.memory_space<vmem>>)
    %c5_73 = arith.constant 5 : index
    %105 = memref.load %arg1[%c5_73] : memref<16xi32, #tpu.memory_space<smem>>
    %c5_i32_74 = arith.constant 5 : i32
    %c0_i32_75 = arith.constant 0 : i32
    %106 = tpu.memref_slice %arg2[%105, %c0_i32_75] : memref<20x128xf32, #tpu.memory_space<any>> -> memref<1x128xf32, #tpu.memory_space<any>>
    %c5_i32_76 = arith.constant 5 : i32
    %c0_i32_77 = arith.constant 0 : i32
    %107 = tpu.memref_slice %arg8[%c5_i32_76, %c0_i32_77] : memref<16x128xf32, #tpu.memory_space<vmem>> -> memref<1x128xf32, #tpu.memory_space<vmem>>
    %108 = tpu.memref_slice %arg9[%c5_i32_74] : memref<16x!tpu.dma_semaphore, #tpu.memory_space<semaphore_mem>> -> memref<1x!tpu.dma_semaphore, #tpu.memory_space<semaphore_mem>>
    %109 = tpu.memref_squeeze %108 : memref<1x!tpu.dma_semaphore, #tpu.memory_space<semaphore_mem>> -> memref<!tpu.dma_semaphore, #tpu.memory_space<semaphore_mem>>
    tpu.wait_dma2 semaphore(%109 : memref<!tpu.dma_semaphore, #tpu.memory_space<semaphore_mem>>) src(%106 : memref<1x128xf32, #tpu.memory_space<any>>) dst(%107 : memref<1x128xf32, #tpu.memory_space<vmem>>)
    %c6_78 = arith.constant 6 : index
    %110 = memref.load %arg1[%c6_78] : memref<16xi32, #tpu.memory_space<smem>>
    %c6_i32_79 = arith.constant 6 : i32
    %c0_i32_80 = arith.constant 0 : i32
    %111 = tpu.memref_slice %arg2[%110, %c0_i32_80] : memref<20x128xf32, #tpu.memory_space<any>> -> memref<1x128xf32, #tpu.memory_space<any>>
    %c6_i32_81 = arith.constant 6 : i32
    %c0_i32_82 = arith.constant 0 : i32
    %112 = tpu.memref_slice %arg8[%c6_i32_81, %c0_i32_82] : memref<16x128xf32, #tpu.memory_space<vmem>> -> memref<1x128xf32, #tpu.memory_space<vmem>>
    %113 = tpu.memref_slice %arg9[%c6_i32_79] : memref<16x!tpu.dma_semaphore, #tpu.memory_space<semaphore_mem>> -> memref<1x!tpu.dma_semaphore, #tpu.memory_space<semaphore_mem>>
    %114 = tpu.memref_squeeze %113 : memref<1x!tpu.dma_semaphore, #tpu.memory_space<semaphore_mem>> -> memref<!tpu.dma_semaphore, #tpu.memory_space<semaphore_mem>>
    tpu.wait_dma2 semaphore(%114 : memref<!tpu.dma_semaphore, #tpu.memory_space<semaphore_mem>>) src(%111 : memref<1x128xf32, #tpu.memory_space<any>>) dst(%112 : memref<1x128xf32, #tpu.memory_space<vmem>>)
    %c7_83 = arith.constant 7 : index
    %115 = memref.load %arg1[%c7_83] : memref<16xi32, #tpu.memory_space<smem>>
    %c7_i32_84 = arith.constant 7 : i32
    %c0_i32_85 = arith.constant 0 : i32
    %116 = tpu.memref_slice %arg2[%115, %c0_i32_85] : memref<20x128xf32, #tpu.memory_space<any>> -> memref<1x128xf32, #tpu.memory_space<any>>
    %c7_i32_86 = arith.constant 7 : i32
    %c0_i32_87 = arith.constant 0 : i32
    %117 = tpu.memref_slice %arg8[%c7_i32_86, %c0_i32_87] : memref<16x128xf32, #tpu.memory_space<vmem>> -> memref<1x128xf32, #tpu.memory_space<vmem>>
    %118 = tpu.memref_slice %arg9[%c7_i32_84] : memref<16x!tpu.dma_semaphore, #tpu.memory_space<semaphore_mem>> -> memref<1x!tpu.dma_semaphore, #tpu.memory_space<semaphore_mem>>
    %119 = tpu.memref_squeeze %118 : memref<1x!tpu.dma_semaphore, #tpu.memory_space<semaphore_mem>> -> memref<!tpu.dma_semaphore, #tpu.memory_space<semaphore_mem>>
    tpu.wait_dma2 semaphore(%119 : memref<!tpu.dma_semaphore, #tpu.memory_space<semaphore_mem>>) src(%116 : memref<1x128xf32, #tpu.memory_space<any>>) dst(%117 : memref<1x128xf32, #tpu.memory_space<vmem>>)
    %c8_88 = arith.constant 8 : index
    %120 = memref.load %arg1[%c8_88] : memref<16xi32, #tpu.memory_space<smem>>
    %c8_i32_89 = arith.constant 8 : i32
    %c0_i32_90 = arith.constant 0 : i32
    %121 = tpu.memref_slice %arg2[%120, %c0_i32_90] : memref<20x128xf32, #tpu.memory_space<any>> -> memref<1x128xf32, #tpu.memory_space<any>>
    %c8_i32_91 = arith.constant 8 : i32
    %c0_i32_92 = arith.constant 0 : i32
    %122 = tpu.memref_slice %arg8[%c8_i32_91, %c0_i32_92] : memref<16x128xf32, #tpu.memory_space<vmem>> -> memref<1x128xf32, #tpu.memory_space<vmem>>
    %123 = tpu.memref_slice %arg9[%c8_i32_89] : memref<16x!tpu.dma_semaphore, #tpu.memory_space<semaphore_mem>> -> memref<1x!tpu.dma_semaphore, #tpu.memory_space<semaphore_mem>>
    %124 = tpu.memref_squeeze %123 : memref<1x!tpu.dma_semaphore, #tpu.memory_space<semaphore_mem>> -> memref<!tpu.dma_semaphore, #tpu.memory_space<semaphore_mem>>
    tpu.wait_dma2 semaphore(%124 : memref<!tpu.dma_semaphore, #tpu.memory_space<semaphore_mem>>) src(%121 : memref<1x128xf32, #tpu.memory_space<any>>) dst(%122 : memref<1x128xf32, #tpu.memory_space<vmem>>)
    %c9_93 = arith.constant 9 : index
    %125 = memref.load %arg1[%c9_93] : memref<16xi32, #tpu.memory_space<smem>>
    %c9_i32_94 = arith.constant 9 : i32
    %c0_i32_95 = arith.constant 0 : i32
    %126 = tpu.memref_slice %arg2[%125, %c0_i32_95] : memref<20x128xf32, #tpu.memory_space<any>> -> memref<1x128xf32, #tpu.memory_space<any>>
    %c9_i32_96 = arith.constant 9 : i32
    %c0_i32_97 = arith.constant 0 : i32
    %127 = tpu.memref_slice %arg8[%c9_i32_96, %c0_i32_97] : memref<16x128xf32, #tpu.memory_space<vmem>> -> memref<1x128xf32, #tpu.memory_space<vmem>>
    %128 = tpu.memref_slice %arg9[%c9_i32_94] : memref<16x!tpu.dma_semaphore, #tpu.memory_space<semaphore_mem>> -> memref<1x!tpu.dma_semaphore, #tpu.memory_space<semaphore_mem>>
    %129 = tpu.memref_squeeze %128 : memref<1x!tpu.dma_semaphore, #tpu.memory_space<semaphore_mem>> -> memref<!tpu.dma_semaphore, #tpu.memory_space<semaphore_mem>>
    tpu.wait_dma2 semaphore(%129 : memref<!tpu.dma_semaphore, #tpu.memory_space<semaphore_mem>>) src(%126 : memref<1x128xf32, #tpu.memory_space<any>>) dst(%127 : memref<1x128xf32, #tpu.memory_space<vmem>>)
    %c10_98 = arith.constant 10 : index
    %130 = memref.load %arg1[%c10_98] : memref<16xi32, #tpu.memory_space<smem>>
    %c10_i32_99 = arith.constant 10 : i32
    %c0_i32_100 = arith.constant 0 : i32
    %131 = tpu.memref_slice %arg2[%130, %c0_i32_100] : memref<20x128xf32, #tpu.memory_space<any>> -> memref<1x128xf32, #tpu.memory_space<any>>
    %c10_i32_101 = arith.constant 10 : i32
    %c0_i32_102 = arith.constant 0 : i32
    %132 = tpu.memref_slice %arg8[%c10_i32_101, %c0_i32_102] : memref<16x128xf32, #tpu.memory_space<vmem>> -> memref<1x128xf32, #tpu.memory_space<vmem>>
    %133 = tpu.memref_slice %arg9[%c10_i32_99] : memref<16x!tpu.dma_semaphore, #tpu.memory_space<semaphore_mem>> -> memref<1x!tpu.dma_semaphore, #tpu.memory_space<semaphore_mem>>
    %134 = tpu.memref_squeeze %133 : memref<1x!tpu.dma_semaphore, #tpu.memory_space<semaphore_mem>> -> memref<!tpu.dma_semaphore, #tpu.memory_space<semaphore_mem>>
    tpu.wait_dma2 semaphore(%134 : memref<!tpu.dma_semaphore, #tpu.memory_space<semaphore_mem>>) src(%131 : memref<1x128xf32, #tpu.memory_space<any>>) dst(%132 : memref<1x128xf32, #tpu.memory_space<vmem>>)
    %c11_103 = arith.constant 11 : index
    %135 = memref.load %arg1[%c11_103] : memref<16xi32, #tpu.memory_space<smem>>
    %c11_i32_104 = arith.constant 11 : i32
    %c0_i32_105 = arith.constant 0 : i32
    %136 = tpu.memref_slice %arg2[%135, %c0_i32_105] : memref<20x128xf32, #tpu.memory_space<any>> -> memref<1x128xf32, #tpu.memory_space<any>>
    %c11_i32_106 = arith.constant 11 : i32
    %c0_i32_107 = arith.constant 0 : i32
    %137 = tpu.memref_slice %arg8[%c11_i32_106, %c0_i32_107] : memref<16x128xf32, #tpu.memory_space<vmem>> -> memref<1x128xf32, #tpu.memory_space<vmem>>
    %138 = tpu.memref_slice %arg9[%c11_i32_104] : memref<16x!tpu.dma_semaphore, #tpu.memory_space<semaphore_mem>> -> memref<1x!tpu.dma_semaphore, #tpu.memory_space<semaphore_mem>>
    %139 = tpu.memref_squeeze %138 : memref<1x!tpu.dma_semaphore, #tpu.memory_space<semaphore_mem>> -> memref<!tpu.dma_semaphore, #tpu.memory_space<semaphore_mem>>
    tpu.wait_dma2 semaphore(%139 : memref<!tpu.dma_semaphore, #tpu.memory_space<semaphore_mem>>) src(%136 : memref<1x128xf32, #tpu.memory_space<any>>) dst(%137 : memref<1x128xf32, #tpu.memory_space<vmem>>)
    %c12_108 = arith.constant 12 : index
    %140 = memref.load %arg1[%c12_108] : memref<16xi32, #tpu.memory_space<smem>>
    %c12_i32_109 = arith.constant 12 : i32
    %c0_i32_110 = arith.constant 0 : i32
    %141 = tpu.memref_slice %arg2[%140, %c0_i32_110] : memref<20x128xf32, #tpu.memory_space<any>> -> memref<1x128xf32, #tpu.memory_space<any>>
    %c12_i32_111 = arith.constant 12 : i32
    %c0_i32_112 = arith.constant 0 : i32
    %142 = tpu.memref_slice %arg8[%c12_i32_111, %c0_i32_112] : memref<16x128xf32, #tpu.memory_space<vmem>> -> memref<1x128xf32, #tpu.memory_space<vmem>>
    %143 = tpu.memref_slice %arg9[%c12_i32_109] : memref<16x!tpu.dma_semaphore, #tpu.memory_space<semaphore_mem>> -> memref<1x!tpu.dma_semaphore, #tpu.memory_space<semaphore_mem>>
    %144 = tpu.memref_squeeze %143 : memref<1x!tpu.dma_semaphore, #tpu.memory_space<semaphore_mem>> -> memref<!tpu.dma_semaphore, #tpu.memory_space<semaphore_mem>>
    tpu.wait_dma2 semaphore(%144 : memref<!tpu.dma_semaphore, #tpu.memory_space<semaphore_mem>>) src(%141 : memref<1x128xf32, #tpu.memory_space<any>>) dst(%142 : memref<1x128xf32, #tpu.memory_space<vmem>>)
    %c13_113 = arith.constant 13 : index
    %145 = memref.load %arg1[%c13_113] : memref<16xi32, #tpu.memory_space<smem>>
    %c13_i32_114 = arith.constant 13 : i32
    %c0_i32_115 = arith.constant 0 : i32
    %146 = tpu.memref_slice %arg2[%145, %c0_i32_115] : memref<20x128xf32, #tpu.memory_space<any>> -> memref<1x128xf32, #tpu.memory_space<any>>
    %c13_i32_116 = arith.constant 13 : i32
    %c0_i32_117 = arith.constant 0 : i32
    %147 = tpu.memref_slice %arg8[%c13_i32_116, %c0_i32_117] : memref<16x128xf32, #tpu.memory_space<vmem>> -> memref<1x128xf32, #tpu.memory_space<vmem>>
    %148 = tpu.memref_slice %arg9[%c13_i32_114] : memref<16x!tpu.dma_semaphore, #tpu.memory_space<semaphore_mem>> -> memref<1x!tpu.dma_semaphore, #tpu.memory_space<semaphore_mem>>
    %149 = tpu.memref_squeeze %148 : memref<1x!tpu.dma_semaphore, #tpu.memory_space<semaphore_mem>> -> memref<!tpu.dma_semaphore, #tpu.memory_space<semaphore_mem>>
    tpu.wait_dma2 semaphore(%149 : memref<!tpu.dma_semaphore, #tpu.memory_space<semaphore_mem>>) src(%146 : memref<1x128xf32, #tpu.memory_space<any>>) dst(%147 : memref<1x128xf32, #tpu.memory_space<vmem>>)
    %c14_118 = arith.constant 14 : index
    %150 = memref.load %arg1[%c14_118] : memref<16xi32, #tpu.memory_space<smem>>
    %c14_i32_119 = arith.constant 14 : i32
    %c0_i32_120 = arith.constant 0 : i32
    %151 = tpu.memref_slice %arg2[%150, %c0_i32_120] : memref<20x128xf32, #tpu.memory_space<any>> -> memref<1x128xf32, #tpu.memory_space<any>>
    %c14_i32_121 = arith.constant 14 : i32
    %c0_i32_122 = arith.constant 0 : i32
    %152 = tpu.memref_slice %arg8[%c14_i32_121, %c0_i32_122] : memref<16x128xf32, #tpu.memory_space<vmem>> -> memref<1x128xf32, #tpu.memory_space<vmem>>
    %153 = tpu.memref_slice %arg9[%c14_i32_119] : memref<16x!tpu.dma_semaphore, #tpu.memory_space<semaphore_mem>> -> memref<1x!tpu.dma_semaphore, #tpu.memory_space<semaphore_mem>>
    %154 = tpu.memref_squeeze %153 : memref<1x!tpu.dma_semaphore, #tpu.memory_space<semaphore_mem>> -> memref<!tpu.dma_semaphore, #tpu.memory_space<semaphore_mem>>
    tpu.wait_dma2 semaphore(%154 : memref<!tpu.dma_semaphore, #tpu.memory_space<semaphore_mem>>) src(%151 : memref<1x128xf32, #tpu.memory_space<any>>) dst(%152 : memref<1x128xf32, #tpu.memory_space<vmem>>)
    %c15_123 = arith.constant 15 : index
    %155 = memref.load %arg1[%c15_123] : memref<16xi32, #tpu.memory_space<smem>>
    %c15_i32_124 = arith.constant 15 : i32
    %c0_i32_125 = arith.constant 0 : i32
    %156 = tpu.memref_slice %arg2[%155, %c0_i32_125] : memref<20x128xf32, #tpu.memory_space<any>> -> memref<1x128xf32, #tpu.memory_space<any>>
    %c15_i32_126 = arith.constant 15 : i32
    %c0_i32_127 = arith.constant 0 : i32
    %157 = tpu.memref_slice %arg8[%c15_i32_126, %c0_i32_127] : memref<16x128xf32, #tpu.memory_space<vmem>> -> memref<1x128xf32, #tpu.memory_space<vmem>>
    %158 = tpu.memref_slice %arg9[%c15_i32_124] : memref<16x!tpu.dma_semaphore, #tpu.memory_space<semaphore_mem>> -> memref<1x!tpu.dma_semaphore, #tpu.memory_space<semaphore_mem>>
    %159 = tpu.memref_squeeze %158 : memref<1x!tpu.dma_semaphore, #tpu.memory_space<semaphore_mem>> -> memref<!tpu.dma_semaphore, #tpu.memory_space<semaphore_mem>>
    tpu.wait_dma2 semaphore(%159 : memref<!tpu.dma_semaphore, #tpu.memory_space<semaphore_mem>>) src(%156 : memref<1x128xf32, #tpu.memory_space<any>>) dst(%157 : memref<1x128xf32, #tpu.memory_space<vmem>>)
    %c0_128 = arith.constant 0 : index
    %c0_129 = arith.constant 0 : index
    %160 = vector.load %arg8[%c0_128, %c0_129] : memref<16x128xf32, #tpu.memory_space<vmem>>, vector<16x128xf32>
    %c0_130 = arith.constant 0 : index
    %c0_131 = arith.constant 0 : index
    %161 = vector.load %arg3[%c0_130, %c0_131] : memref<128x640xf32, #tpu.memory_space<vmem>>, vector<128x640xf32>
    %cst = arith.constant dense<0.000000e+00> : vector<16x640xf32>
    %162 = tpu.matmul %160, %161, %cst {dimension_numbers = #tpu.dot_dimension_numbers<[1], [0], [0], [1], [0, 0, 1, 1], [], []>} : vector<16x128xf32>, vector<128x640xf32>, vector<16x640xf32> -> vector<16x640xf32>
    %163 = vector.shape_cast %162 : vector<16x640xf32> to vector<2x8x640xf32>
    %cst_132 = arith.constant 0.000000e+00 : f32
    %164 = vector.broadcast %cst_132 : f32 to vector<2x4x640xf32>
    %165 = tpu.concatenate %164, %163, %164 in 1 : vector<2x4x640xf32>, vector<2x8x640xf32>, vector<2x4x640xf32> -> vector<2x16x640xf32>
    %166 = vector.extract_strided_slice %165 {offsets = [0, 4, 0], sizes = [2, 12, 128], strides = [1, 1, 1]} : vector<2x16x640xf32> to vector<2x12x128xf32>
    %167 = vector.extract_strided_slice %165 {offsets = [0, 3, 128], sizes = [2, 12, 128], strides = [1, 1, 1]} : vector<2x16x640xf32> to vector<2x12x128xf32>
    %168 = arith.addf %166, %167 : vector<2x12x128xf32>
    %169 = vector.extract_strided_slice %165 {offsets = [0, 2, 256], sizes = [2, 12, 128], strides = [1, 1, 1]} : vector<2x16x640xf32> to vector<2x12x128xf32>
    %170 = arith.addf %168, %169 : vector<2x12x128xf32>
    %171 = vector.extract_strided_slice %165 {offsets = [0, 1, 384], sizes = [2, 12, 128], strides = [1, 1, 1]} : vector<2x16x640xf32> to vector<2x12x128xf32>
    %172 = arith.addf %170, %171 : vector<2x12x128xf32>
    %173 = vector.extract_strided_slice %165 {offsets = [0, 0, 512], sizes = [2, 12, 128], strides = [1, 1, 1]} : vector<2x16x640xf32> to vector<2x12x128xf32>
    %174 = arith.addf %172, %173 : vector<2x12x128xf32>
    %c0_133 = arith.constant 0 : index
    %c0_134 = arith.constant 0 : index
    %175 = vector.load %arg4[%c0_133, %c0_134] : memref<12x128xf32, #tpu.memory_space<vmem>>, vector<12x128xf32>
    %176 = vector.shape_cast %175 : vector<12x128xf32> to vector<1x12x128xf32>
    %177 = vector.broadcast %176 : vector<1x12x128xf32> to vector<2x12x128xf32>
    %178 = arith.addf %174, %177 : vector<2x12x128xf32>
    %cst_135 = arith.constant dense<0xFF800000> : vector<2x128xf32>
    %179 = vector.multi_reduction <maximumf>, %178, %cst_135 [1] : vector<2x12x128xf32> to vector<2x128xf32>
    %180 = math.tanh %179 : vector<2x128xf32>
    %c0_136 = arith.constant 0 : index
    %c0_137 = arith.constant 0 : index
    %181 = vector.load %arg5[%c0_136, %c0_137] : memref<128x128xf32, #tpu.memory_space<vmem>>, vector<128x128xf32>
    %cst_138 = arith.constant dense<0.000000e+00> : vector<2x128xf32>
    %182 = tpu.matmul %180, %181, %cst_138 {dimension_numbers = #tpu.dot_dimension_numbers<[1], [0], [0], [1], [0, 0, 1, 1], [], []>} : vector<2x128xf32>, vector<128x128xf32>, vector<2x128xf32> -> vector<2x128xf32>
    %c0_139 = arith.constant 0 : index
    %c0_140 = arith.constant 0 : index
    %183 = vector.load %arg6[%c0_139, %c0_140] : memref<1x128xf32, #tpu.memory_space<vmem>>, vector<1x128xf32>
    %184 = vector.broadcast %183 : vector<1x128xf32> to vector<2x128xf32>
    %185 = arith.addf %182, %184 : vector<2x128xf32>
    %c0_141 = arith.constant 0 : index
    %c0_142 = arith.constant 0 : index
    %186 = vector.load %arg7[%c0_141, %c0_142] : memref<2x128xf32, #tpu.memory_space<vmem>>, vector<2x128xf32>
    tpu.vector_store %arg7[%c0_141, %c0_142], %185 {strides = array<i32>} : memref<2x128xf32, #tpu.memory_space<vmem>>, vector<2x128xf32>,
    return
  }
  func.func @transform_1(%arg0: i32, %arg1: memref<16xi32, #tpu.memory_space<smem>>) -> (i32, i32) {
    %c0_i32 = arith.constant 0 : i32
    %c0_i32_0 = arith.constant 0 : i32
    %c0_i32_1 = arith.constant 0 : i32
    return %c0_i32, %c0_i32_0 : i32, i32
  }
  func.func @transform_2(%arg0: i32, %arg1: memref<16xi32, #tpu.memory_space<smem>>) -> (i32, i32) {
    %c0_i32 = arith.constant 0 : i32
    %c0_i32_0 = arith.constant 0 : i32
    %c0_i32_1 = arith.constant 0 : i32
    return %c0_i32, %c0_i32_0 : i32, i32
  }
  func.func @transform_3(%arg0: i32, %arg1: memref<16xi32, #tpu.memory_space<smem>>) -> (i32, i32) {
    %c0_i32 = arith.constant 0 : i32
    %c0_i32_0 = arith.constant 0 : i32
    %c0_i32_1 = arith.constant 0 : i32
    return %c0_i32, %c0_i32_0 : i32, i32
  }
  func.func @transform_4(%arg0: i32, %arg1: memref<16xi32, #tpu.memory_space<smem>>) -> (i32, i32) {
    %c0_i32 = arith.constant 0 : i32
    %c0_i32_0 = arith.constant 0 : i32
    %c0_i32_1 = arith.constant 0 : i32
    return %c0_i32, %c0_i32_0 : i32, i32
  }
  func.func @transform_5(%arg0: i32, %arg1: memref<16xi32, #tpu.memory_space<smem>>) -> (i32, i32) {
    %c0_i32 = arith.constant 0 : i32
    %c0_i32_0 = arith.constant 0 : i32
    %c0_i32_1 = arith.constant 0 : i32
    return %c0_i32, %c0_i32_0 : i32, i32
  }
}

</mosaic_0001>

<llo_original>
// kernel: tpu_custom_call.1
$region0: #{tpu_custom_call.1}
  #allocation0 [shape = 'u32[]', space=smem, size = 0x4, offset = 0x4, fixed_abs, tag = 'smem constant byte address 0x4 - core index']
  #allocation1 [shape = 'u32[144,128]{1,0:T(1,128)}', space=vmem, size = 0x12000, scoped, tag = 'internal scratch']
  #allocation2 [shape = 'f32[16,128]{1,0:T(8,128)}', space=vmem, size = 0x2000, scoped, tag = 'scratch operand']
  #allocation3 [shape = 's32[16]{0}', space=sflag, size = 0x40, scoped, tag = 'scratch operand']
  #allocation4 [shape = 's32[1]{0}', space=sflag, size = 0x4, scoped, tag = 'scoped memory for tpu_custom_call.1']
  #allocation5 [shape = 'u8[512]{0}', space=smem, size = 0x200, scoped, tag = 'prefetched SMEM operand 0']
  #allocation13 [shape = 's32[]', space=sflag, size = 0x4, offset = 0, fixed_abs, tag = 'sflag constant byte address 0x0 - dummy sync flag']
  #allocation14 [shape = 's32[]', space=sflag, size = 0x4, offset = 0, fixed_abs, tag = 'sflag constant byte address 0x0 - dummy sync flag']
  #allocation15 [shape = 'u32[]', space=smem, size = 0x4, offset = 0x44, fixed_abs, tag = 'smem constant byte address 0x44 - assertion arg 0']
  #allocation16 [shape = 'u32[]', space=smem, size = 0x4, offset = 0x48, fixed_abs, tag = 'smem constant byte address 0x48 - assertion arg 1']
  #allocation17 [shape = 's32[]', space=sflag, size = 0x4, offset = 0, fixed_abs, tag = 'sflag constant byte address 0x0 - dummy sync flag']
  #allocation18 [shape = 's32[]', space=sflag, size = 0x4, offset = 0, fixed_abs, tag = 'sflag constant byte address 0x0 - dummy sync flag']
  #allocation19 [shape = 's32[]', space=sflag, size = 0x4, offset = 0, fixed_abs, tag = 'sflag constant byte address 0x0 - dummy sync flag']
  #allocation20 [shape = 's32[]', space=sflag, size = 0x4, offset = 0, fixed_abs, tag = 'sflag constant byte address 0x0 - dummy sync flag']
  #allocation21 [shape = 's32[]', space=sflag, size = 0x4, offset = 0, fixed_abs, tag = 'sflag constant byte address 0x0 - dummy sync flag']
  #allocation22 [shape = 's32[]', space=sflag, size = 0x4, offset = 0, fixed_abs, tag = 'sflag constant byte address 0x0 - dummy sync flag']
  #allocation23 [shape = 's32[]', space=sflag, size = 0x4, offset = 0, fixed_abs, tag = 'sflag constant byte address 0x0 - dummy sync flag']
  #allocation24 [shape = 's32[]', space=sflag, size = 0x4, offset = 0, fixed_abs, tag = 'sflag constant byte address 0x0 - dummy sync flag']
  #allocation25 [shape = 's32[]', space=sflag, size = 0x4, offset = 0, fixed_abs, tag = 'sflag constant byte address 0x0 - dummy sync flag']
  #allocation26 [shape = 's32[]', space=sflag, size = 0x4, offset = 0, fixed_abs, tag = 'sflag constant byte address 0x0 - dummy sync flag']
  #allocation27 [shape = 's32[]', space=sflag, size = 0x4, offset = 0, fixed_abs, tag = 'sflag constant byte address 0x0 - dummy sync flag']
  #allocation28 [shape = 's32[]', space=sflag, size = 0x4, offset = 0, fixed_abs, tag = 'sflag constant byte address 0x0 - dummy sync flag']
  #allocation29 [shape = 's32[]', space=sflag, size = 0x4, offset = 0, fixed_abs, tag = 'sflag constant byte address 0x0 - dummy sync flag']
  #allocation30 [shape = 's32[]', space=sflag, size = 0x4, offset = 0, fixed_abs, tag = 'sflag constant byte address 0x0 - dummy sync flag']
  #allocation31 [shape = 's32[]', space=sflag, size = 0x4, offset = 0, fixed_abs, tag = 'sflag constant byte address 0x0 - dummy sync flag']
  #allocation32 [shape = 's32[]', space=sflag, size = 0x4, offset = 0, fixed_abs, tag = 'sflag constant byte address 0x0 - dummy sync flag']
  #allocation33 [shape = 's32[]', space=sflag, size = 0x4, offset = 0, fixed_abs, tag = 'sflag constant byte address 0x0 - dummy sync flag']
  #allocation34 [shape = 's32[]', space=sflag, size = 0x4, offset = 0, fixed_abs, tag = 'sflag constant byte address 0x0 - dummy sync flag']
  #allocation35 [shape = 's32[]', space=sflag, size = 0x4, offset = 0, fixed_abs, tag = 'sflag constant byte address 0x0 - dummy sync flag']
  #allocation36 [shape = 's32[]', space=sflag, size = 0x4, offset = 0, fixed_abs, tag = 'sflag constant byte address 0x0 - dummy sync flag']
  #allocation37 [shape = 's32[]', space=sflag, size = 0x4, offset = 0, fixed_abs, tag = 'sflag constant byte address 0x0 - dummy sync flag']
  #allocation38 [shape = 's32[]', space=sflag, size = 0x4, offset = 0, fixed_abs, tag = 'sflag constant byte address 0x0 - dummy sync flag']
  #allocation39 [shape = 's32[]', space=sflag, size = 0x4, offset = 0, fixed_abs, tag = 'sflag constant byte address 0x0 - dummy sync flag']
  #allocation40 [shape = 's32[]', space=sflag, size = 0x4, offset = 0, fixed_abs, tag = 'sflag constant byte address 0x0 - dummy sync flag']
  #allocation41 [shape = 's32[]', space=sflag, size = 0x4, offset = 0, fixed_abs, tag = 'sflag constant byte address 0x0 - dummy sync flag']
  #allocation42 [shape = 's32[]', space=sflag, size = 0x4, offset = 0, fixed_abs, tag = 'sflag constant byte address 0x0 - dummy sync flag']
  #allocation43 [shape = 's32[]', space=sflag, size = 0x4, offset = 0, fixed_abs, tag = 'sflag constant byte address 0x0 - dummy sync flag']
  #allocation44 [shape = 's32[]', space=sflag, size = 0x4, offset = 0, fixed_abs, tag = 'sflag constant byte address 0x0 - dummy sync flag']
  #allocation45 [shape = 's32[]', space=sflag, size = 0x4, offset = 0, fixed_abs, tag = 'sflag constant byte address 0x0 - dummy sync flag']
  #allocation46 [shape = 's32[]', space=sflag, size = 0x4, offset = 0, fixed_abs, tag = 'sflag constant byte address 0x0 - dummy sync flag']
  %s0 = inlined_call_operand.hbm [shape: s32[16], index: 0, kind: input, shape index: {}]
  %s1 = inlined_call_operand.hbm [shape: f32[20,128], index: 1, kind: input, shape index: {}]
  %s2 = inlined_call_operand.hbm [shape: f32[128,640], index: 2, kind: input, shape index: {}]
  %s3 = inlined_call_operand.hbm [shape: f32[12,128], index: 3, kind: input, shape index: {}]
  %s4 = inlined_call_operand.hbm [shape: f32[128,128], index: 4, kind: input, shape index: {}]
  %s5 = inlined_call_operand.vmem [shape: f32[1,128], index: 5, kind: input, shape index: {}]
  %s6 = inlined_call_operand.hbm [shape: f32[2,128], index: 6, kind: output, shape index: {}]
  %s7 = sld [smem:[#allocation0]]
  $region102: #{tpu_custom_call.1} parent=0
    _
  %s9 = ssub.s32 1, %s7
  %s10 = scalar_select 0, %s9, %s7
  %12 = dma.hbm_to_smem %s0, 16, [#allocation5], [#allocation4]
  %13 = dma.done [#allocation4], 16
  %14 = sfence
  $region1: #{tpu_custom_call.1} parent=0
    #allocation6 [shape = 'u8[327680]{0}', space=vmem, size = 0x50000, scoped, tag = 'input window, operand 2, single buffered']
    #allocation7 [shape = 's32[1]{0}', space=sflag, size = 0x4, scoped, tag = 'scoped memory for tpu_custom_call.1']
    #allocation8 [shape = 's32[1]{0}', space=sflag, size = 0x4, scoped, tag = 'scoped memory for tpu_custom_call.1']
    #allocation9 [shape = 'u8[8192]{0}', space=vmem, size = 0x2000, scoped, tag = 'input window, operand 3, single buffered']
    #allocation10 [shape = 's32[1]{0}', space=sflag, size = 0x4, scoped, tag = 'scoped memory for tpu_custom_call.1']
    #allocation11 [shape = 'u8[65536]{0}', space=vmem, size = 0x10000, scoped, tag = 'input window, operand 4, single buffered']
    #allocation12 [shape = 'u8[1024]{0}', space=vmem, size = 0x400, scoped, tag = 'output window, operand 0, single buffered']
    %15 = vsyncpa [#allocation7], 0
    %16 = vsyncpa [#allocation10], 0
    %17 = vsyncpa [#allocation8], 0
    // Predicated region
    $region2: #{tpu_custom_call.1} parent=1 // pred_check
      _
    $region3: #{tpu_custom_call.1} parent=1 // pred_check_branch
      %19 = sbr.rel (0) target = $region5
    $region4: #{tpu_custom_call.1} parent=1 // pred_region
      %s21 = ssub.s32 10240, 10240
      %22 = vsyncadd [#allocation7], %s21
      %s23 = sshll.u32 [#allocation6], 4
      %s24 = int_to_ptr.vmem [resolvable:$true] %s23
      %29 = dma.hbm_to_vmem [thread:$0]  %s2, 10240, %s24, [#allocation7], 640, 640, 40
    $region5: #{tpu_custom_call.1} parent=1 // pred_fallthru
      _
    // Predicated region
    $region6: #{tpu_custom_call.1} parent=1 // pred_check
      _
    $region7: #{tpu_custom_call.1} parent=1 // pred_check_branch
      %31 = sbr.rel (0) target = $region9
    $region8: #{tpu_custom_call.1} parent=1 // pred_region
      %s33 = ssub.s32 256, 256
      %34 = vsyncadd [#allocation10], %s33
      %s35 = sshll.u32 [#allocation9], 4
      %s36 = int_to_ptr.vmem [resolvable:$true] %s35
      %41 = dma.hbm_to_vmem [thread:$0]  %s3, 256, %s36, [#allocation10], 128, 128, 8
    $region9: #{tpu_custom_call.1} parent=1 // pred_fallthru
      _
    // Predicated region
    $region10: #{tpu_custom_call.1} parent=1 // pred_check
      _
    $region11: #{tpu_custom_call.1} parent=1 // pred_check_branch
      %43 = sbr.rel (0) target = $region13
    $region12: #{tpu_custom_call.1} parent=1 // pred_region
      %s45 = ssub.s32 2048, 2048
      %46 = vsyncadd [#allocation10], %s45
      %s47 = sshll.u32 [#allocation11], 4
      %s48 = int_to_ptr.vmem [resolvable:$true] %s47
      %53 = dma.hbm_to_vmem [thread:$0]  %s4, 2048, %s48, [#allocation10], 128, 128, 8
    $region13: #{tpu_custom_call.1} parent=1 // pred_fallthru
      _
    // Predicated region
    $region14: #{tpu_custom_call.1} parent=1 // pred_check
      _
    $region15: #{tpu_custom_call.1} parent=1 // pred_check_branch
      %55 = sbr.rel (0) target = $region17
    $region16: #{tpu_custom_call.1} parent=1 // pred_region
      _
    $region17: #{tpu_custom_call.1} parent=1 // pred_fallthru
      _
    // Predicated region
    $region18: #{tpu_custom_call.1} parent=1 // pred_check
      _
    $region19: #{tpu_custom_call.1} parent=1 // pred_check_branch
      %57 = sbr.rel (0) target = $region21
    $region20: #{tpu_custom_call.1} parent=1 // pred_region
      %58 = dma.done [#allocation7], 10240
    $region21: #{tpu_custom_call.1} parent=1 // pred_fallthru
      _
    // Predicated region
    $region22: #{tpu_custom_call.1} parent=1 // pred_check
      _
    $region23: #{tpu_custom_call.1} parent=1 // pred_check_branch
      %60 = sbr.rel (0) target = $region25
    $region24: #{tpu_custom_call.1} parent=1 // pred_region
      %61 = dma.done [#allocation10], 256
    $region25: #{tpu_custom_call.1} parent=1 // pred_fallthru
      _
    // Predicated region
    $region26: #{tpu_custom_call.1} parent=1 // pred_check
      _
    $region27: #{tpu_custom_call.1} parent=1 // pred_check_branch
      %63 = sbr.rel (0) target = $region29
    $region28: #{tpu_custom_call.1} parent=1 // pred_region
      %64 = dma.done [#allocation10], 2048
    $region29: #{tpu_custom_call.1} parent=1 // pred_fallthru
      _
    %s65 = sld [smem:[#allocation5]]
    %s66 = smul.addr %s65, 16
    %s67 = scalar_lea.hbm %s1, %s66
    // Predicated region
    $region30: #{tpu_custom_call.1} parent=1 // pred_check
      _
    $region31: #{tpu_custom_call.1} parent=1 // pred_check_branch
      %69 = sbr.rel target = $region33
    $region32: #{tpu_custom_call.1} parent=1 // pred_region
      %70 = sst [smem:[#allocation15]] [#allocation14]
      %71 = sst [smem:[#allocation16]] [#allocation13]
    $region33: #{tpu_custom_call.1} parent=1 // pred_fallthru
      _
    %73 = shalt.err (0)
    %s75 = sshll.u32 [#allocation2], 4
    %s76 = int_to_ptr.vmem [resolvable:$true] %s75
    %78 = dma.hbm_to_vmem [thread:$0]  %s67, 16, %s76, [#allocation3]
    %s79 = sld [smem:[#allocation5 + $0x1]]
    %s80 = smul.addr %s79, 16
    %s81 = scalar_lea.hbm %s1, %s80
    %s82 = scalar_lea.vmem [#allocation2], 1
    %s83 = scalar_lea.sflag [#allocation3], 1
    // Predicated region
    $region34: #{tpu_custom_call.1} parent=1 // pred_check
      _
    $region35: #{tpu_custom_call.1} parent=1 // pred_check_branch
      %85 = sbr.rel target = $region37
    $region36: #{tpu_custom_call.1} parent=1 // pred_region
      %86 = sst [smem:[#allocation15]] [#allocation18]
      %87 = sst [smem:[#allocation16]] [#allocation17]
    $region37: #{tpu_custom_call.1} parent=1 // pred_fallthru
      _
    %89 = shalt.err (0)
    %s91 = sshll.u32 %s82, 4
    %s92 = int_to_ptr.vmem [resolvable:$true] %s91
    %94 = dma.hbm_to_vmem [thread:$0]  %s81, 16, %s92, %s83
    %s95 = sld [smem:[#allocation5 + $0x2]]
    %s96 = smul.addr %s95, 16
    %s97 = scalar_lea.hbm %s1, %s96
    %s98 = scalar_lea.vmem [#allocation2], 2
    %s99 = scalar_lea.sflag [#allocation3], 2
    // Predicated region
    $region38: #{tpu_custom_call.1} parent=1 // pred_check
      _
    $region39: #{tpu_custom_call.1} parent=1 // pred_check_branch
      %101 = sbr.rel target = $region41
    $region40: #{tpu_custom_call.1} parent=1 // pred_region
      %102 = sst [smem:[#allocation15]] [#allocation20]
      %103 = sst [smem:[#allocation16]] [#allocation19]
    $region41: #{tpu_custom_call.1} parent=1 // pred_fallthru
      _
    %105 = shalt.err (0)
    %s107 = sshll.u32 %s98, 4
    %s108 = int_to_ptr.vmem [resolvable:$true] %s107
    %110 = dma.hbm_to_vmem [thread:$0]  %s97, 16, %s108, %s99
    %s111 = sld [smem:[#allocation5 + $0x3]]
    %s112 = smul.addr %s111, 16
    %s113 = scalar_lea.hbm %s1, %s112
    %s114 = scalar_lea.vmem [#allocation2], 3
    %s115 = scalar_lea.sflag [#allocation3], 3
    // Predicated region
    $region42: #{tpu_custom_call.1} parent=1 // pred_check
      _
    $region43: #{tpu_custom_call.1} parent=1 // pred_check_branch
      %117 = sbr.rel target = $region45
    $region44: #{tpu_custom_call.1} parent=1 // pred_region
      %118 = sst [smem:[#allocation15]] [#allocation22]
      %119 = sst [smem:[#allocation16]] [#allocation21]
    $region45: #{tpu_custom_call.1} parent=1 // pred_fallthru
      _
    %121 = shalt.err (0)
    %s123 = sshll.u32 %s114, 4
    %s124 = int_to_ptr.vmem [resolvable:$true] %s123
    %126 = dma.hbm_to_vmem [thread:$0]  %s113, 16, %s124, %s115
    %s127 = sld [smem:[#allocation5 + $0x4]]
    %s128 = smul.addr %s127, 16
    %s129 = scalar_lea.hbm %s1, %s128
    %s130 = scalar_lea.vmem [#allocation2], 4
    %s131 = scalar_lea.sflag [#allocation3], 4
    // Predicated region
    $region46: #{tpu_custom_call.1} parent=1 // pred_check
      _
    $region47: #{tpu_custom_call.1} parent=1 // pred_check_branch
      %133 = sbr.rel target = $region49
    $region48: #{tpu_custom_call.1} parent=1 // pred_region
      %134 = sst [smem:[#allocation15]] [#allocation24]
      %135 = sst [smem:[#allocation16]] [#allocation23]
    $region49: #{tpu_custom_call.1} parent=1 // pred_fallthru
      _
    %137 = shalt.err (0)
    %s139 = sshll.u32 %s130, 4
    %s140 = int_to_ptr.vmem [resolvable:$true] %s139
    %142 = dma.hbm_to_vmem [thread:$0]  %s129, 16, %s140, %s131
    %s143 = sld [smem:[#allocation5 + $0x5]]
    %s144 = smul.addr %s143, 16
    %s145 = scalar_lea.hbm %s1, %s144
    %s146 = scalar_lea.vmem [#allocation2], 5
    %s147 = scalar_lea.sflag [#allocation3], 5
    // Predicated region
    $region50: #{tpu_custom_call.1} parent=1 // pred_check
      _
    $region51: #{tpu_custom_call.1} parent=1 // pred_check_branch
      %149 = sbr.rel target = $region53
    $region52: #{tpu_custom_call.1} parent=1 // pred_region
      %150 = sst [smem:[#allocation15]] [#allocation26]
      %151 = sst [smem:[#allocation16]] [#allocation25]
    $region53: #{tpu_custom_call.1} parent=1 // pred_fallthru
      _
    %153 = shalt.err (0)
    %s155 = sshll.u32 %s146, 4
    %s156 = int_to_ptr.vmem [resolvable:$true] %s155
    %158 = dma.hbm_to_vmem [thread:$0]  %s145, 16, %s156, %s147
    %s159 = sld [smem:[#allocation5 + $0x6]]
    %s160 = smul.addr %s159, 16
    %s161 = scalar_lea.hbm %s1, %s160
    %s162 = scalar_lea.vmem [#allocation2], 6
    %s163 = scalar_lea.sflag [#allocation3], 6
    // Predicated region
    $region54: #{tpu_custom_call.1} parent=1 // pred_check
      _
    $region55: #{tpu_custom_call.1} parent=1 // pred_check_branch
      %165 = sbr.rel target = $region57
    $region56: #{tpu_custom_call.1} parent=1 // pred_region
      %166 = sst [smem:[#allocation15]] [#allocation28]
      %167 = sst [smem:[#allocation16]] [#allocation27]
    $region57: #{tpu_custom_call.1} parent=1 // pred_fallthru
      _
    %169 = shalt.err (0)
    %s171 = sshll.u32 %s162, 4
    %s172 = int_to_ptr.vmem [resolvable:$true] %s171
    %174 = dma.hbm_to_vmem [thread:$0]  %s161, 16, %s172, %s163
    %s175 = sld [smem:[#allocation5 + $0x7]]
    %s176 = smul.addr %s175, 16
    %s177 = scalar_lea.hbm %s1, %s176
    %s178 = scalar_lea.vmem [#allocation2], 7
    %s179 = scalar_lea.sflag [#allocation3], 7
    // Predicated region
    $region58: #{tpu_custom_call.1} parent=1 // pred_check
      _
    $region59: #{tpu_custom_call.1} parent=1 // pred_check_branch
      %181 = sbr.rel target = $region61
    $region60: #{tpu_custom_call.1} parent=1 // pred_region
      %182 = sst [smem:[#allocation15]] [#allocation30]
      %183 = sst [smem:[#allocation16]] [#allocation29]
    $region61: #{tpu_custom_call.1} parent=1 // pred_fallthru
      _
    %185 = shalt.err (0)
    %s187 = sshll.u32 %s178, 4
    %s188 = int_to_ptr.vmem [resolvable:$true] %s187
    %190 = dma.hbm_to_vmem [thread:$0]  %s177, 16, %s188, %s179
    %s191 = sld [smem:[#allocation5 + $0x8]]
    %s192 = smul.addr %s191, 16
    %s193 = scalar_lea.hbm %s1, %s192
    %s194 = scalar_lea.vmem [#allocation2], 8
    %s195 = scalar_lea.sflag [#allocation3], 8
    // Predicated region
    $region62: #{tpu_custom_call.1} parent=1 // pred_check
      _
    $region63: #{tpu_custom_call.1} parent=1 // pred_check_branch
      %197 = sbr.rel target = $region65
    $region64: #{tpu_custom_call.1} parent=1 // pred_region
      %198 = sst [smem:[#allocation15]] [#allocation32]
      %199 = sst [smem:[#allocation16]] [#allocation31]
    $region65: #{tpu_custom_call.1} parent=1 // pred_fallthru
      _
    %201 = shalt.err (0)
    %s203 = sshll.u32 %s194, 4
    %s204 = int_to_ptr.vmem [resolvable:$true] %s203
    %206 = dma.hbm_to_vmem [thread:$0]  %s193, 16, %s204, %s195
    %s207 = sld [smem:[#allocation5 + $0x9]]
    %s208 = smul.addr %s207, 16
    %s209 = scalar_lea.hbm %s1, %s208
    %s210 = scalar_lea.vmem [#allocation2], 9
    %s211 = scalar_lea.sflag [#allocation3], 9
    // Predicated region
    $region66: #{tpu_custom_call.1} parent=1 // pred_check
      _
    $region67: #{tpu_custom_call.1} parent=1 // pred_check_branch
      %213 = sbr.rel target = $region69
    $region68: #{tpu_custom_call.1} parent=1 // pred_region
      %214 = sst [smem:[#allocation15]] [#allocation34]
      %215 = sst [smem:[#allocation16]] [#allocation33]
    $region69: #{tpu_custom_call.1} parent=1 // pred_fallthru
      _
    %217 = shalt.err (0)
    %s219 = sshll.u32 %s210, 4
    %s220 = int_to_ptr.vmem [resolvable:$true] %s219
    %222 = dma.hbm_to_vmem [thread:$0]  %s209, 16, %s220, %s211
    %s223 = sld [smem:[#allocation5 + $0xa]]
    %s224 = smul.addr %s223, 16
    %s225 = scalar_lea.hbm %s1, %s224
    %s226 = scalar_lea.vmem [#allocation2], 10
    %s227 = scalar_lea.sflag [#allocation3], 10
    // Predicated region
    $region70: #{tpu_custom_call.1} parent=1 // pred_check
      _
    $region71: #{tpu_custom_call.1} parent=1 // pred_check_branch
      %229 = sbr.rel target = $region73
    $region72: #{tpu_custom_call.1} parent=1 // pred_region
      %230 = sst [smem:[#allocation15]] [#allocation36]
      %231 = sst [smem:[#allocation16]] [#allocation35]
    $region73: #{tpu_custom_call.1} parent=1 // pred_fallthru
      _
    %233 = shalt.err (0)
    %s235 = sshll.u32 %s226, 4
    %s236 = int_to_ptr.vmem [resolvable:$true] %s235
    %238 = dma.hbm_to_vmem [thread:$0]  %s225, 16, %s236, %s227
    %s239 = sld [smem:[#allocation5 + $0xb]]
    %s240 = smul.addr %s239, 16
    %s241 = scalar_lea.hbm %s1, %s240
    %s242 = scalar_lea.vmem [#allocation2], 11
    %s243 = scalar_lea.sflag [#allocation3], 11
    // Predicated region
    $region74: #{tpu_custom_call.1} parent=1 // pred_check
      _
    $region75: #{tpu_custom_call.1} parent=1 // pred_check_branch
      %245 = sbr.rel target = $region77
    $region76: #{tpu_custom_call.1} parent=1 // pred_region
      %246 = sst [smem:[#allocation15]] [#allocation38]
      %247 = sst [smem:[#allocation16]] [#allocation37]
    $region77: #{tpu_custom_call.1} parent=1 // pred_fallthru
      _
    %249 = shalt.err (0)
    %s251 = sshll.u32 %s242, 4
    %s252 = int_to_ptr.vmem [resolvable:$true] %s251
    %254 = dma.hbm_to_vmem [thread:$0]  %s241, 16, %s252, %s243
    %s255 = sld [smem:[#allocation5 + $0xc]]
    %s256 = smul.addr %s255, 16
    %s257 = scalar_lea.hbm %s1, %s256
    %s258 = scalar_lea.vmem [#allocation2], 12
    %s259 = scalar_lea.sflag [#allocation3], 12
    // Predicated region
    $region78: #{tpu_custom_call.1} parent=1 // pred_check
      _
    $region79: #{tpu_custom_call.1} parent=1 // pred_check_branch
      %261 = sbr.rel target = $region81
    $region80: #{tpu_custom_call.1} parent=1 // pred_region
      %262 = sst [smem:[#allocation15]] [#allocation40]
      %263 = sst [smem:[#allocation16]] [#allocation39]
    $region81: #{tpu_custom_call.1} parent=1 // pred_fallthru
      _
    %265 = shalt.err (0)
    %s267 = sshll.u32 %s258, 4
    %s268 = int_to_ptr.vmem [resolvable:$true] %s267
    %270 = dma.hbm_to_vmem [thread:$0]  %s257, 16, %s268, %s259
    %s271 = sld [smem:[#allocation5 + $0xd]]
    %s272 = smul.addr %s271, 16
    %s273 = scalar_lea.hbm %s1, %s272
    %s274 = scalar_lea.vmem [#allocation2], 13
    %s275 = scalar_lea.sflag [#allocation3], 13
    // Predicated region
    $region82: #{tpu_custom_call.1} parent=1 // pred_check
      _
    $region83: #{tpu_custom_call.1} parent=1 // pred_check_branch
      %277 = sbr.rel target = $region85
    $region84: #{tpu_custom_call.1} parent=1 // pred_region
      %278 = sst [smem:[#allocation15]] [#allocation42]
      %279 = sst [smem:[#allocation16]] [#allocation41]
    $region85: #{tpu_custom_call.1} parent=1 // pred_fallthru
      _
    %281 = shalt.err (0)
    %s283 = sshll.u32 %s274, 4
    %s284 = int_to_ptr.vmem [resolvable:$true] %s283
    %286 = dma.hbm_to_vmem [thread:$0]  %s273, 16, %s284, %s275
    %s287 = sld [smem:[#allocation5 + $0xe]]
    %s288 = smul.addr %s287, 16
    %s289 = scalar_lea.hbm %s1, %s288
    %s290 = scalar_lea.vmem [#allocation2], 14
    %s291 = scalar_lea.sflag [#allocation3], 14
    // Predicated region
    $region86: #{tpu_custom_call.1} parent=1 // pred_check
      _
    $region87: #{tpu_custom_call.1} parent=1 // pred_check_branch
      %293 = sbr.rel target = $region89
    $region88: #{tpu_custom_call.1} parent=1 // pred_region
      %294 = sst [smem:[#allocation15]] [#allocation44]
      %295 = sst [smem:[#allocation16]] [#allocation43]
    $region89: #{tpu_custom_call.1} parent=1 // pred_fallthru
      _
    %297 = shalt.err (0)
    %s299 = sshll.u32 %s290, 4
    %s300 = int_to_ptr.vmem [resolvable:$true] %s299
    %302 = dma.hbm_to_vmem [thread:$0]  %s289, 16, %s300, %s291
    %s303 = sld [smem:[#allocation5 + $0xf]]
    %s304 = smul.addr %s303, 16
    %s305 = scalar_lea.hbm %s1, %s304
    %s306 = scalar_lea.vmem [#allocation2], 15
    %s307 = scalar_lea.sflag [#allocation3], 15
    // Predicated region
    $region90: #{tpu_custom_call.1} parent=1 // pred_check
      _
    $region91: #{tpu_custom_call.1} parent=1 // pred_check_branch
      %309 = sbr.rel target = $region93
    $region92: #{tpu_custom_call.1} parent=1 // pred_region
      %310 = sst [smem:[#allocation15]] [#allocation46]
      %311 = sst [smem:[#allocation16]] [#allocation45]
    $region93: #{tpu_custom_call.1} parent=1 // pred_fallthru
      _
    %313 = shalt.err (0)
    %s315 = sshll.u32 %s306, 4
    %s316 = int_to_ptr.vmem [resolvable:$true] %s315
    %318 = dma.hbm_to_vmem [thread:$0]  %s305, 16, %s316, %s307
    %s319 = sld [smem:[#allocation5]]
    %s320 = smul.u32 1, 1
    %s321 = sshll.u32 %s320, 4
    %322 = dma.done [#allocation3], %s321
    %s323 = sld [smem:[#allocation5 + $0x1]]
    %s324 = sshll.u32 %s320, 4
    %325 = dma.done %s83, %s324
    %s326 = sld [smem:[#allocation5 + $0x2]]
    %s327 = sshll.u32 %s320, 4
    %328 = dma.done %s99, %s327
    %s329 = sld [smem:[#allocation5 + $0x3]]
    %s330 = sshll.u32 %s320, 4
    %331 = dma.done %s115, %s330
    %s332 = sld [smem:[#allocation5 + $0x4]]
    %s333 = sshll.u32 %s320, 4
    %334 = dma.done %s131, %s333
    %s335 = sld [smem:[#allocation5 + $0x5]]
    %s336 = sshll.u32 %s320, 4
    %337 = dma.done %s147, %s336
    %s338 = sld [smem:[#allocation5 + $0x6]]
    %s339 = sshll.u32 %s320, 4
    %340 = dma.done %s163, %s339
    %s341 = sld [smem:[#allocation5 + $0x7]]
    %s342 = sshll.u32 %s320, 4
    %343 = dma.done %s179, %s342
    %s344 = sld [smem:[#allocation5 + $0x8]]
    %s345 = sshll.u32 %s320, 4
    %346 = dma.done %s195, %s345
    %s347 = sld [smem:[#allocation5 + $0x9]]
    %s348 = sshll.u32 %s320, 4
    %349 = dma.done %s211, %s348
    %s350 = sld [smem:[#allocation5 + $0xa]]
    %s351 = sshll.u32 %s320, 4
    %352 = dma.done %s227, %s351
    %s353 = sld [smem:[#allocation5 + $0xb]]
    %s354 = sshll.u32 %s320, 4
    %355 = dma.done %s243, %s354
    %s356 = sld [smem:[#allocation5 + $0xc]]
    %s357 = sshll.u32 %s320, 4
    %358 = dma.done %s259, %s357
    %s359 = sld [smem:[#allocation5 + $0xd]]
    %s360 = sshll.u32 %s320, 4
    %361 = dma.done %s275, %s360
    %s362 = sld [smem:[#allocation5 + $0xe]]
    %s363 = sshll.u32 %s320, 4
    %364 = dma.done %s291, %s363
    %s365 = sld [smem:[#allocation5 + $0xf]]
    %s366 = sshll.u32 %s320, 4
    %367 = dma.done %s307, %s366
    %v368 = vld [vmem:[#allocation2] sm:$0xff]
    %v369 = vld [vmem:[#allocation2 + $0x8] sm:$0xff]
    %v370 = vld [vmem:[#allocation6] sm:$0xff]
    %v371 = vld [vmem:[#allocation6 + $0x8] sm:$0xff]
    %v372 = vld [vmem:[#allocation6 + $0x10] sm:$0xff]
    %v373 = vld [vmem:[#allocation6 + $0x18] sm:$0xff]
    %v374 = vld [vmem:[#allocation6 + $0x20] sm:$0xff]
    %v375 = vld [vmem:[#allocation6 + $0x28] sm:$0xff]
    %v376 = vld [vmem:[#allocation6 + $0x30] sm:$0xff]
    %v377 = vld [vmem:[#allocation6 + $0x38] sm:$0xff]
    %v378 = vld [vmem:[#allocation6 + $0x40] sm:$0xff]
    %v379 = vld [vmem:[#allocation6 + $0x48] sm:$0xff]
    %v380 = vld [vmem:[#allocation6 + $0x50] sm:$0xff]
    %v381 = vld [vmem:[#allocation6 + $0x58] sm:$0xff]
    %v382 = vld [vmem:[#allocation6 + $0x60] sm:$0xff]
    %v383 = vld [vmem:[#allocation6 + $0x68] sm:$0xff]
    %v384 = vld [vmem:[#allocation6 + $0x70] sm:$0xff]
    %v385 = vld [vmem:[#allocation6 + $0x78] sm:$0xff]
    %v386 = vld [vmem:[#allocation6 + $0x80] sm:$0xff]
    %v387 = vld [vmem:[#allocation6 + $0x88] sm:$0xff]
    %v388 = vld [vmem:[#allocation6 + $0x90] sm:$0xff]
    %v389 = vld [vmem:[#allocation6 + $0x98] sm:$0xff]
    %v390 = vld [vmem:[#allocation6 + $0xa0] sm:$0xff]
    %v391 = vld [vmem:[#allocation6 + $0xa8] sm:$0xff]
    %v392 = vld [vmem:[#allocation6 + $0xb0] sm:$0xff]
    %v393 = vld [vmem:[#allocation6 + $0xb8] sm:$0xff]
    %v394 = vld [vmem:[#allocation6 + $0xc0] sm:$0xff]
    %v395 = vld [vmem:[#allocation6 + $0xc8] sm:$0xff]
    %v396 = vld [vmem:[#allocation6 + $0xd0] sm:$0xff]
    %v397 = vld [vmem:[#allocation6 + $0xd8] sm:$0xff]
    %v398 = vld [vmem:[#allocation6 + $0xe0] sm:$0xff]
    %v399 = vld [vmem:[#allocation6 + $0xe8] sm:$0xff]
    %v400 = vld [vmem:[#allocation6 + $0xf0] sm:$0xff]
    %v401 = vld [vmem:[#allocation6 + $0xf8] sm:$0xff]
    %v402 = vld [vmem:[#allocation6 + $0x100] sm:$0xff]
    %v403 = vld [vmem:[#allocation6 + $0x108] sm:$0xff]
    %v404 = vld [vmem:[#allocation6 + $0x110] sm:$0xff]
    %v405 = vld [vmem:[#allocation6 + $0x118] sm:$0xff]
    %v406 = vld [vmem:[#allocation6 + $0x120] sm:$0xff]
    %v407 = vld [vmem:[#allocation6 + $0x128] sm:$0xff]
    %v408 = vld [vmem:[#allocation6 + $0x130] sm:$0xff]
    %v409 = vld [vmem:[#allocation6 + $0x138] sm:$0xff]
    %v410 = vld [vmem:[#allocation6 + $0x140] sm:$0xff]
    %v411 = vld [vmem:[#allocation6 + $0x148] sm:$0xff]
    %v412 = vld [vmem:[#allocation6 + $0x150] sm:$0xff]
    %v413 = vld [vmem:[#allocation6 + $0x158] sm:$0xff]
    %v414 = vld [vmem:[#allocation6 + $0x160] sm:$0xff]
    %v415 = vld [vmem:[#allocation6 + $0x168] sm:$0xff]
    %v416 = vld [vmem:[#allocation6 + $0x170] sm:$0xff]
    %v417 = vld [vmem:[#allocation6 + $0x178] sm:$0xff]
    %v418 = vld [vmem:[#allocation6 + $0x180] sm:$0xff]
    %v419 = vld [vmem:[#allocation6 + $0x188] sm:$0xff]
    %v420 = vld [vmem:[#allocation6 + $0x190] sm:$0xff]
    %v421 = vld [vmem:[#allocation6 + $0x198] sm:$0xff]
    %v422 = vld [vmem:[#allocation6 + $0x1a0] sm:$0xff]
    %v423 = vld [vmem:[#allocation6 + $0x1a8] sm:$0xff]
    %v424 = vld [vmem:[#allocation6 + $0x1b0] sm:$0xff]
    %v425 = vld [vmem:[#allocation6 + $0x1b8] sm:$0xff]
    %v426 = vld [vmem:[#allocation6 + $0x1c0] sm:$0xff]
    %v427 = vld [vmem:[#allocation6 + $0x1c8] sm:$0xff]
    %v428 = vld [vmem:[#allocation6 + $0x1d0] sm:$0xff]
    %v429 = vld [vmem:[#allocation6 + $0x1d8] sm:$0xff]
    %v430 = vld [vmem:[#allocation6 + $0x1e0] sm:$0xff]
    %v431 = vld [vmem:[#allocation6 + $0x1e8] sm:$0xff]
    %v432 = vld [vmem:[#allocation6 + $0x1f0] sm:$0xff]
    %v433 = vld [vmem:[#allocation6 + $0x1f8] sm:$0xff]
    %v434 = vld [vmem:[#allocation6 + $0x200] sm:$0xff]
    %v435 = vld [vmem:[#allocation6 + $0x208] sm:$0xff]
    %v436 = vld [vmem:[#allocation6 + $0x210] sm:$0xff]
    %v437 = vld [vmem:[#allocation6 + $0x218] sm:$0xff]
    %v438 = vld [vmem:[#allocation6 + $0x220] sm:$0xff]
    %v439 = vld [vmem:[#allocation6 + $0x228] sm:$0xff]
    %v440 = vld [vmem:[#allocation6 + $0x230] sm:$0xff]
    %v441 = vld [vmem:[#allocation6 + $0x238] sm:$0xff]
    %v442 = vld [vmem:[#allocation6 + $0x240] sm:$0xff]
    %v443 = vld [vmem:[#allocation6 + $0x248] sm:$0xff]
    %v444 = vld [vmem:[#allocation6 + $0x250] sm:$0xff]
    %v445 = vld [vmem:[#allocation6 + $0x258] sm:$0xff]
    %v446 = vld [vmem:[#allocation6 + $0x260] sm:$0xff]
    %v447 = vld [vmem:[#allocation6 + $0x268] sm:$0xff]
    %v448 = vld [vmem:[#allocation6 + $0x270] sm:$0xff]
    %v449 = vld [vmem:[#allocation6 + $0x278] sm:$0xff]
    %450 = vmatprep.subr.mxu0 %v371
    %451 = vmatpush1.msra.mxu0 %v370
    %452 = vmatprep.subr.mxu0 %v376
    %453 = vmatpush1.msra.mxu0 %v375
    %454 = vmatprep.subr.mxu0 %v381
    %455 = vmatpush1.msra.mxu0 %v380
    %456 = vmatprep.subr.mxu0 %v386
    %457 = vmatpush1.msra.mxu0 %v385
    %458 = vmatprep.subr.mxu0 %v391
    %459 = vmatpush1.msra.mxu0 %v390
    %460 = vmatprep.subr.mxu0 %v396
    %461 = vmatpush1.msra.mxu0 %v395
    %462 = vmatprep.subr.mxu0 %v401
    %463 = vmatpush1.msra.mxu0 %v400
    %464 = vmatprep.subr.mxu0 %v406
    %465 = vmatpush1.msra.mxu0 %v405
    %466 = vmatprep.subr.mxu0 %v411
    %467 = vmatpush1.msra.mxu0 %v410
    %468 = vmatprep.subr.mxu0 %v416
    %469 = vmatpush1.msra.mxu0 %v415
    %470 = vmatprep.subr.mxu0 %v421
    %471 = vmatpush1.msra.mxu0 %v420
    %472 = vmatprep.subr.mxu0 %v426
    %473 = vmatpush1.msra.mxu0 %v425
    %474 = vmatprep.subr.mxu0 %v431
    %475 = vmatpush1.msra.mxu0 %v430
    %476 = vmatprep.subr.mxu0 %v436
    %477 = vmatpush1.msra.mxu0 %v435
    %478 = vmatprep.subr.mxu0 %v441
    %479 = vmatpush1.msra.mxu0 %v440
    %480 = vmatprep.subr.mxu0 %v446
    %481 = vmatpush1.msra.mxu0 %v445
    %482 = vmatprep.subr.mxu0 0.0
    %483 = vmatpush1.msra.mxu0 0.0
    %484 = vmatprep.subr.mxu0 0.0
    %485 = vmatpush1.msra.mxu0 0.0
    %486 = vmatprep.subr.mxu0 0.0
    %487 = vmatpush1.msra.mxu0 0.0
    %488 = vmatprep.subr.mxu0 0.0
    %489 = vmatpush1.msra.mxu0 0.0
    %490 = vmatprep.subr.mxu0 0.0
    %491 = vmatpush1.msra.mxu0 0.0
    %492 = vmatprep.subr.mxu0 0.0
    %493 = vmatpush1.msra.mxu0 0.0
    %494 = vmatprep.subr.mxu0 0.0
    %495 = vmatpush1.msra.mxu0 0.0
    %496 = vmatprep.subr.mxu0 0.0
    %497 = vmatpush1.msra.mxu0 0.0
    %498 = vmatprep.subr.mxu0 0.0
    %499 = vmatpush1.msra.mxu0 0.0
    %500 = vmatprep.subr.mxu0 0.0
    %501 = vmatpush1.msra.mxu0 0.0
    %502 = vmatprep.subr.mxu0 0.0
    %503 = vmatpush1.msra.mxu0 0.0
    %504 = vmatprep.subr.mxu0 0.0
    %505 = vmatpush1.msra.mxu0 0.0
    %506 = vmatprep.subr.mxu0 0.0
    %507 = vmatpush1.msra.mxu0 0.0
    %508 = vmatprep.subr.mxu0 0.0
    %509 = vmatpush1.msra.mxu0 0.0
    %510 = vmatprep.subr.mxu0 0.0
    %511 = vmatpush1.msra.mxu0 0.0
    %512 = vmatprep.subr.mxu0 0.0
    %513 = vmatpush1.msra.mxu0 0.0
    %514 = vmatprep.mubr.f32.mxu0 0.0
    %515 = vmatmul.mubr.f32.gmra.mrb[0].mxu0 %v368
    %v516 = vpop.f32.mrb[0].mxu0
    %v517 = vadd.f32 0.0, %v516
    %v518 = vpop.f32.mrb[0].mxu0
    %v519 = vadd.f32 0.0, %v518
    %520 = vmatprep.mubr.f32.mxu0 0.0
    %521 = vmatmul.mubr.f32.gmra.mrb[0].mxu0 %v369
    %v522 = vpop.f32.mrb[0].mxu0
    %v523 = vadd.f32 0.0, %v522
    %v524 = vpop.f32.mrb[0].mxu0
    %v525 = vadd.f32 0.0, %v524
    %526 = vdwg.mxu0
    %527 = vmatprep.subr.mxu0 %v373
    %528 = vmatpush1.msra.mxu0 %v372
    %529 = vmatprep.subr.mxu0 %v378
    %530 = vmatpush1.msra.mxu0 %v377
    %531 = vmatprep.subr.mxu0 %v383
    %532 = vmatpush1.msra.mxu0 %v382
    %533 = vmatprep.subr.mxu0 %v388
    %534 = vmatpush1.msra.mxu0 %v387
    %535 = vmatprep.subr.mxu0 %v393
    %536 = vmatpush1.msra.mxu0 %v392
    %537 = vmatprep.subr.mxu0 %v398
    %538 = vmatpush1.msra.mxu0 %v397
    %539 = vmatprep.subr.mxu0 %v403
    %540 = vmatpush1.msra.mxu0 %v402
    %541 = vmatprep.subr.mxu0 %v408
    %542 = vmatpush1.msra.mxu0 %v407
    %543 = vmatprep.subr.mxu0 %v413
    %544 = vmatpush1.msra.mxu0 %v412
    %545 = vmatprep.subr.mxu0 %v418
    %546 = vmatpush1.msra.mxu0 %v417
    %547 = vmatprep.subr.mxu0 %v423
    %548 = vmatpush1.msra.mxu0 %v422
    %549 = vmatprep.subr.mxu0 %v428
    %550 = vmatpush1.msra.mxu0 %v427
    %551 = vmatprep.subr.mxu0 %v433
    %552 = vmatpush1.msra.mxu0 %v432
    %553 = vmatprep.subr.mxu0 %v438
    %554 = vmatpush1.msra.mxu0 %v437
    %555 = vmatprep.subr.mxu0 %v443
    %556 = vmatpush1.msra.mxu0 %v442
    %557 = vmatprep.subr.mxu0 %v448
    %558 = vmatpush1.msra.mxu0 %v447
    %559 = vmatprep.subr.mxu0 0.0
    %560 = vmatpush1.msra.mxu0 0.0
    %561 = vmatprep.subr.mxu0 0.0
    %562 = vmatpush1.msra.mxu0 0.0
    %563 = vmatprep.subr.mxu0 0.0
    %564 = vmatpush1.msra.mxu0 0.0
    %565 = vmatprep.subr.mxu0 0.0
    %566 = vmatpush1.msra.mxu0 0.0
    %567 = vmatprep.subr.mxu0 0.0
    %568 = vmatpush1.msra.mxu0 0.0
    %569 = vmatprep.subr.mxu0 0.0
    %570 = vmatpush1.msra.mxu0 0.0
    %571 = vmatprep.subr.mxu0 0.0
    %572 = vmatpush1.msra.mxu0 0.0
    %573 = vmatprep.subr.mxu0 0.0
    %574 = vmatpush1.msra.mxu0 0.0
    %575 = vmatprep.subr.mxu0 0.0
    %576 = vmatpush1.msra.mxu0 0.0
    %577 = vmatprep.subr.mxu0 0.0
    %578 = vmatpush1.msra.mxu0 0.0
    %579 = vmatprep.subr.mxu0 0.0
    %580 = vmatpush1.msra.mxu0 0.0
    %581 = vmatprep.subr.mxu0 0.0
    %582 = vmatpush1.msra.mxu0 0.0
    %583 = vmatprep.subr.mxu0 0.0
    %584 = vmatpush1.msra.mxu0 0.0
    %585 = vmatprep.subr.mxu0 0.0
    %586 = vmatpush1.msra.mxu0 0.0
    %587 = vmatprep.subr.mxu0 0.0
    %588 = vmatpush1.msra.mxu0 0.0
    %589 = vmatprep.subr.mxu0 0.0
    %590 = vmatpush1.msra.mxu0 0.0
    %591 = vmatprep.mubr.f32.mxu0 0.0
    %592 = vmatmul.mubr.f32.gmra.mrb[0].mxu0 %v368
    %v593 = vpop.f32.mrb[0].mxu0
    %v594 = vadd.f32 0.0, %v593
    %v595 = vpop.f32.mrb[0].mxu0
    %v596 = vadd.f32 0.0, %v595
    %597 = vmatprep.mubr.f32.mxu0 0.0
    %598 = vmatmul.mubr.f32.gmra.mrb[0].mxu0 %v369
    %v599 = vpop.f32.mrb[0].mxu0
    %v600 = vadd.f32 0.0, %v599
    %v601 = vpop.f32.mrb[0].mxu0
    %v602 = vadd.f32 0.0, %v601
    %603 = vdwg.mxu0
    %604 = vmatprep.subr.mxu0 0.0
    %605 = vmatpush1.msra.mxu0 %v374
    %606 = vmatprep.subr.mxu0 0.0
    %607 = vmatpush1.msra.mxu0 %v379
    %608 = vmatprep.subr.mxu0 0.0
    %609 = vmatpush1.msra.mxu0 %v384
    %610 = vmatprep.subr.mxu0 0.0
    %611 = vmatpush1.msra.mxu0 %v389
    %612 = vmatprep.subr.mxu0 0.0
    %613 = vmatpush1.msra.mxu0 %v394
    %614 = vmatprep.subr.mxu0 0.0
    %615 = vmatpush1.msra.mxu0 %v399
    %616 = vmatprep.subr.mxu0 0.0
    %617 = vmatpush1.msra.mxu0 %v404
    %618 = vmatprep.subr.mxu0 0.0
    %619 = vmatpush1.msra.mxu0 %v409
    %620 = vmatprep.subr.mxu0 0.0
    %621 = vmatpush1.msra.mxu0 %v414
    %622 = vmatprep.subr.mxu0 0.0
    %623 = vmatpush1.msra.mxu0 %v419
    %624 = vmatprep.subr.mxu0 0.0
    %625 = vmatpush1.msra.mxu0 %v424
    %626 = vmatprep.subr.mxu0 0.0
    %627 = vmatpush1.msra.mxu0 %v429
    %628 = vmatprep.subr.mxu0 0.0
    %629 = vmatpush1.msra.mxu0 %v434
    %630 = vmatprep.subr.mxu0 0.0
    %631 = vmatpush1.msra.mxu0 %v439
    %632 = vmatprep.subr.mxu0 0.0
    %633 = vmatpush1.msra.mxu0 %v444
    %634 = vmatprep.subr.mxu0 0.0
    %635 = vmatpush1.msra.mxu0 %v449
    %636 = vmatprep.subr.mxu0 0.0
    %637 = vmatpush1.msra.mxu0 0.0
    %638 = vmatprep.subr.mxu0 0.0
    %639 = vmatpush1.msra.mxu0 0.0
    %640 = vmatprep.subr.mxu0 0.0
    %641 = vmatpush1.msra.mxu0 0.0
    %642 = vmatprep.subr.mxu0 0.0
    %643 = vmatpush1.msra.mxu0 0.0
    %644 = vmatprep.subr.mxu0 0.0
    %645 = vmatpush1.msra.mxu0 0.0
    %646 = vmatprep.subr.mxu0 0.0
    %647 = vmatpush1.msra.mxu0 0.0
    %648 = vmatprep.subr.mxu0 0.0
    %649 = vmatpush1.msra.mxu0 0.0
    %650 = vmatprep.subr.mxu0 0.0
    %651 = vmatpush1.msra.mxu0 0.0
    %652 = vmatprep.subr.mxu0 0.0
    %653 = vmatpush1.msra.mxu0 0.0
    %654 = vmatprep.subr.mxu0 0.0
    %655 = vmatpush1.msra.mxu0 0.0
    %656 = vmatprep.subr.mxu0 0.0
    %657 = vmatpush1.msra.mxu0 0.0
    %658 = vmatprep.subr.mxu0 0.0
    %659 = vmatpush1.msra.mxu0 0.0
    %660 = vmatprep.subr.mxu0 0.0
    %661 = vmatpush1.msra.mxu0 0.0
    %662 = vmatprep.subr.mxu0 0.0
    %663 = vmatpush1.msra.mxu0 0.0
    %664 = vmatprep.subr.mxu0 0.0
    %665 = vmatpush1.msra.mxu0 0.0
    %666 = vmatprep.subr.mxu0 0.0
    %667 = vmatpush1.msra.mxu0 0.0
    %668 = vmatprep.mubr.f32.mxu0 0.0
    %669 = vmatmul.mubr.f32.gmra.mrb[0].mxu0 %v368
    %v670 = vpop.f32.mrb[0].mxu0
    %v671 = vadd.f32 0.0, %v670
    %v672 = vpop.f32.mrb[0].mxu0
    %673 = vmatprep.mubr.f32.mxu0 0.0
    %674 = vmatmul.mubr.f32.gmra.mrb[0].mxu0 %v369
    %v675 = vpop.f32.mrb[0].mxu0
    %v676 = vadd.f32 0.0, %v675
    %v677 = vpop.f32.mrb[0].mxu0
    %678 = vdwg.mxu0
    %v689 = vrot.slane %v517, 4
    %v690 = vrot.slane %v519, 4
    %v691 = vrot.slane %v594, 4
    %v692 = vrot.slane %v596, 4
    %v693 = vrot.slane %v671, 4
    %v694 = vrot.slane %v523, 4
    %v695 = vrot.slane %v525, 4
    %v696 = vrot.slane %v600, 4
    %v697 = vrot.slane %v602, 4
    %v698 = vrot.slane %v676, 4
    %vm709 = vcmask 1043456
    %v710 = vsel %vm709, 0.0, %v689
    %v711 = vsel %vm709, 0.0, %v690
    %v712 = vsel %vm709, 0.0, %v691
    %v713 = vsel %vm709, 0.0, %v692
    %v714 = vsel %vm709, 0.0, %v693
    %v715 = vsel %vm709, 0.0, %v694
    %v716 = vsel %vm709, 0.0, %v695
    %v717 = vsel %vm709, 0.0, %v696
    %v718 = vsel %vm709, 0.0, %v697
    %v719 = vsel %vm709, 0.0, %v698
    %v720 = vsel %vm709, %v689, 0.0
    %v721 = vsel %vm709, %v690, 0.0
    %v722 = vsel %vm709, %v691, 0.0
    %v723 = vsel %vm709, %v692, 0.0
    %v724 = vsel %vm709, %v693, 0.0
    %v725 = vsel %vm709, %v694, 0.0
    %v726 = vsel %vm709, %v695, 0.0
    %v727 = vsel %vm709, %v696, 0.0
    %v728 = vsel %vm709, %v697, 0.0
    %v729 = vsel %vm709, %v698, 0.0
    %vm734 = vcmask 1040384
    %v735 = vrot.slane %v711, 7
    %v736 = vrot.slane %v721, 7
    %v737 = vsel %vm734, %v735, %v736
    %v738 = vrot.slane %v716, 7
    %v739 = vrot.slane %v726, 7
    %v740 = vsel %vm734, %v738, %v739
    %v745 = vadd.f32 %v710, %v735
    %v746 = vadd.f32 %v720, %v737
    %v747 = vadd.f32 %v715, %v738
    %v748 = vadd.f32 %v725, %v740
    %vm753 = vcmask 1041408
    %v754 = vrot.slane %v712, 6
    %v755 = vrot.slane %v722, 6
    %v756 = vsel %vm753, %v754, %v755
    %v757 = vrot.slane %v717, 6
    %v758 = vrot.slane %v727, 6
    %v759 = vsel %vm753, %v757, %v758
    %v764 = vadd.f32 %v745, %v754
    %v765 = vadd.f32 %v746, %v756
    %v766 = vadd.f32 %v747, %v757
    %v767 = vadd.f32 %v748, %v759
    %vm772 = vcmask 1042432
    %v773 = vrot.slane %v713, 5
    %v774 = vrot.slane %v723, 5
    %v775 = vsel %vm772, %v773, %v774
    %v776 = vrot.slane %v718, 5
    %v777 = vrot.slane %v728, 5
    %v778 = vsel %vm772, %v776, %v777
    %v783 = vadd.f32 %v764, %v773
    %v784 = vadd.f32 %v765, %v775
    %v785 = vadd.f32 %v766, %v776
    %v786 = vadd.f32 %v767, %v778
    %v791 = vrot.slane %v714, 4
    %v792 = vrot.slane %v724, 4
    %v793 = vsel %vm709, %v791, %v792
    %v794 = vrot.slane %v719, 4
    %v795 = vrot.slane %v729, 4
    %v796 = vsel %vm709, %v794, %v795
    %v801 = vadd.f32 %v783, %v791
    %v802 = vadd.f32 %v784, %v793
    %v803 = vadd.f32 %v785, %v794
    %v804 = vadd.f32 %v786, %v796
    %v805 = vld [vmem:[#allocation9] sm:$0xff]
    %v806 = vld [vmem:[#allocation9 + $0x8] sm:$0xf]
    %v809 = vrot.slane %v805, 4
    %v810 = vrot.slane %v806, 4
    %v811 = vsel %vm709, %v809, %v810
    %v814 = vadd.f32 %v801, %v809
    %v815 = vadd.f32 %v802, %v811
    %v816 = vadd.f32 %v803, %v809
    %v817 = vadd.f32 %v804, %v811
    %vm818 = vcmask 1047556
    %v819 = vsel %vm818, %v814, -inf
    %v820 = vmax.f32 %v819, %v815
    %v821 = vrot.slane %v820, 4
    %v822 = vmax.f32 %v820, %v821
    %v823 = vrot.slane %v822, 2
    %v824 = vmax.f32 %v822, %v823
    %v825 = vrot.slane %v824, 1
    %v826 = vmax.f32 %v824, %v825
    %v827 = vsel %vm818, %v816, -inf
    %v828 = vmax.f32 %v827, %v817
    %v829 = vrot.slane %v828, 4
    %v830 = vmax.f32 %v828, %v829
    %v831 = vrot.slane %v830, 2
    %v832 = vmax.f32 %v830, %v831
    %v833 = vrot.slane %v832, 1
    %v834 = vmax.f32 %v832, %v833
    %v835 = vtanh.pop %v826
    %v836 = vtanh.pop %v834
    %v837 = vld [vmem:[#allocation11] sm:$0xff]
    %v838 = vld [vmem:[#allocation11 + $0x8] sm:$0xff]
    %v839 = vld [vmem:[#allocation11 + $0x10] sm:$0xff]
    %v840 = vld [vmem:[#allocation11 + $0x18] sm:$0xff]
    %v841 = vld [vmem:[#allocation11 + $0x20] sm:$0xff]
    %v842 = vld [vmem:[#allocation11 + $0x28] sm:$0xff]
    %v843 = vld [vmem:[#allocation11 + $0x30] sm:$0xff]
    %v844 = vld [vmem:[#allocation11 + $0x38] sm:$0xff]
    %v845 = vld [vmem:[#allocation11 + $0x40] sm:$0xff]
    %v846 = vld [vmem:[#allocation11 + $0x48] sm:$0xff]
    %v847 = vld [vmem:[#allocation11 + $0x50] sm:$0xff]
    %v848 = vld [vmem:[#allocation11 + $0x58] sm:$0xff]
    %v849 = vld [vmem:[#allocation11 + $0x60] sm:$0xff]
    %v850 = vld [vmem:[#allocation11 + $0x68] sm:$0xff]
    %v851 = vld [vmem:[#allocation11 + $0x70] sm:$0xff]
    %v852 = vld [vmem:[#allocation11 + $0x78] sm:$0xff]
    %v853 = vld [vmem:[%s5] sm:$0x1]
    %v855 = vlaneseq
    %v856 = vshrl.u32 %v855, 7
    %v857 = vsub.s32 0, %v856
    %v858 = vrot.slane %v853, %v857
    %vm862 = vcmask 1041409
    %v863 = vsel %vm862, %v836, %v835
    %865 = vmatprep.subr.mxu0 0.0
    %866 = vmatpush1.msra.mxu0 %v837
    %867 = vmatprep.subr.mxu0 0.0
    %868 = vmatpush1.msra.mxu0 %v838
    %869 = vmatprep.subr.mxu0 0.0
    %870 = vmatpush1.msra.mxu0 %v839
    %871 = vmatprep.subr.mxu0 0.0
    %872 = vmatpush1.msra.mxu0 %v840
    %873 = vmatprep.subr.mxu0 0.0
    %874 = vmatpush1.msra.mxu0 %v841
    %875 = vmatprep.subr.mxu0 0.0
    %876 = vmatpush1.msra.mxu0 %v842
    %877 = vmatprep.subr.mxu0 0.0
    %878 = vmatpush1.msra.mxu0 %v843
    %879 = vmatprep.subr.mxu0 0.0
    %880 = vmatpush1.msra.mxu0 %v844
    %881 = vmatprep.subr.mxu0 0.0
    %882 = vmatpush1.msra.mxu0 %v845
    %883 = vmatprep.subr.mxu0 0.0
    %884 = vmatpush1.msra.mxu0 %v846
    %885 = vmatprep.subr.mxu0 0.0
    %886 = vmatpush1.msra.mxu0 %v847
    %887 = vmatprep.subr.mxu0 0.0
    %888 = vmatpush1.msra.mxu0 %v848
    %889 = vmatprep.subr.mxu0 0.0
    %890 = vmatpush1.msra.mxu0 %v849
    %891 = vmatprep.subr.mxu0 0.0
    %892 = vmatpush1.msra.mxu0 %v850
    %893 = vmatprep.subr.mxu0 0.0
    %894 = vmatpush1.msra.mxu0 %v851
    %895 = vmatprep.subr.mxu0 0.0
    %896 = vmatpush1.msra.mxu0 %v852
    %897 = vmatprep.subr.mxu0 0.0
    %898 = vmatpush1.msra.mxu0 0.0
    %899 = vmatprep.subr.mxu0 0.0
    %900 = vmatpush1.msra.mxu0 0.0
    %901 = vmatprep.subr.mxu0 0.0
    %902 = vmatpush1.msra.mxu0 0.0
    %903 = vmatprep.subr.mxu0 0.0
    %904 = vmatpush1.msra.mxu0 0.0
    %905 = vmatprep.subr.mxu0 0.0
    %906 = vmatpush1.msra.mxu0 0.0
    %907 = vmatprep.subr.mxu0 0.0
    %908 = vmatpush1.msra.mxu0 0.0
    %909 = vmatprep.subr.mxu0 0.0
    %910 = vmatpush1.msra.mxu0 0.0
    %911 = vmatprep.subr.mxu0 0.0
    %912 = vmatpush1.msra.mxu0 0.0
    %913 = vmatprep.subr.mxu0 0.0
    %914 = vmatpush1.msra.mxu0 0.0
    %915 = vmatprep.subr.mxu0 0.0
    %916 = vmatpush1.msra.mxu0 0.0
    %917 = vmatprep.subr.mxu0 0.0
    %918 = vmatpush1.msra.mxu0 0.0
    %919 = vmatprep.subr.mxu0 0.0
    %920 = vmatpush1.msra.mxu0 0.0
    %921 = vmatprep.subr.mxu0 0.0
    %922 = vmatpush1.msra.mxu0 0.0
    %923 = vmatprep.subr.mxu0 0.0
    %924 = vmatpush1.msra.mxu0 0.0
    %925 = vmatprep.subr.mxu0 0.0
    %926 = vmatpush1.msra.mxu0 0.0
    %927 = vmatprep.subr.mxu0 0.0
    %928 = vmatpush1.msra.mxu0 0.0
    %929 = vmatprep.mubr.f32.mxu0 0.0
    %930 = vmatmul.mubr.f32.gmra.mrb[0].mxu0 %v863
    %v931 = vpop.f32.mrb[0].mxu0
    %v932 = vadd.f32 %v858, %v931
    %v933 = vpop.f32.mrb[0].mxu0
    %934 = vdwg.mxu0
    %935 = vst [vmem:[#allocation12] sm:$0x3] %v932
    // Predicated region
    $region94: #{tpu_custom_call.1} parent=1 // pred_check
      _
    $region95: #{tpu_custom_call.1} parent=1 // pred_check_branch
      %937 = sbr.rel (0) target = $region97
    $region96: #{tpu_custom_call.1} parent=1 // pred_region
      %s939 = ssub.s32 32, 32
      %940 = vsyncadd [#allocation8], %s939
      %s942 = sshll.u32 [#allocation12], 4
      %s943 = int_to_ptr.vmem [resolvable:$true] %s942
      %945 = dma.vmem_to_hbm [thread:$0]  %s943, 32, %s6, [#allocation8]
    $region97: #{tpu_custom_call.1} parent=1 // pred_fallthru
      _
    // Predicated region
    $region98: #{tpu_custom_call.1} parent=1 // pred_check
      _
    $region99: #{tpu_custom_call.1} parent=1 // pred_check_branch
      %947 = sbr.rel (0) target = $region101
    $region100: #{tpu_custom_call.1} parent=1 // pred_region
      %948 = dma.done [#allocation8], 32
    $region101: #{tpu_custom_call.1} parent=1 // pred_fallthru
      _
    %949 = vsyncpa [#allocation7], 1
    %950 = vsyncpa [#allocation10], 1
    %951 = vsyncpa [#allocation8], 1
  %952 = vsyncmov [#allocation3]
  %s953 = vpop.sfrf %952
  %p954 = scmp.eq.s32.totalorder %s953, 0
  %p955 = pneg %p954
  %957 = shalt.err (%p955)
  %s958 = scalar_lea.sflag [#allocation3], 1
  %959 = vsyncmov %s958
  %s960 = vpop.sfrf %959
  %p961 = scmp.eq.s32.totalorder %s960, 0
  %p962 = pneg %p961
  %964 = shalt.err (%p962)
  %s965 = scalar_lea.sflag [#allocation3], 2
  %966 = vsyncmov %s965
  %s967 = vpop.sfrf %966
  %p968 = scmp.eq.s32.totalorder %s967, 0
  %p969 = pneg %p968
  %971 = shalt.err (%p969)
  %s972 = scalar_lea.sflag [#allocation3], 3
  %973 = vsyncmov %s972
  %s974 = vpop.sfrf %973
  %p975 = scmp.eq.s32.totalorder %s974, 0
  %p976 = pneg %p975
  %978 = shalt.err (%p976)
  %s979 = scalar_lea.sflag [#allocation3], 4
  %980 = vsyncmov %s979
  %s981 = vpop.sfrf %980
  %p982 = scmp.eq.s32.totalorder %s981, 0
  %p983 = pneg %p982
  %985 = shalt.err (%p983)
  %s986 = scalar_lea.sflag [#allocation3], 5
  %987 = vsyncmov %s986
  %s988 = vpop.sfrf %987
  %p989 = scmp.eq.s32.totalorder %s988, 0
  %p990 = pneg %p989
  %992 = shalt.err (%p990)
  %s993 = scalar_lea.sflag [#allocation3], 6
  %994 = vsyncmov %s993
  %s995 = vpop.sfrf %994
  %p996 = scmp.eq.s32.totalorder %s995, 0
  %p997 = pneg %p996
  %999 = shalt.err (%p997)
  %s1000 = scalar_lea.sflag [#allocation3], 7
  %1001 = vsyncmov %s1000
  %s1002 = vpop.sfrf %1001
  %p1003 = scmp.eq.s32.totalorder %s1002, 0
  %p1004 = pneg %p1003
  %1006 = shalt.err (%p1004)
  %s1007 = scalar_lea.sflag [#allocation3], 8
  %1008 = vsyncmov %s1007
  %s1009 = vpop.sfrf %1008
  %p1010 = scmp.eq.s32.totalorder %s1009, 0
  %p1011 = pneg %p1010
  %1013 = shalt.err (%p1011)
  %s1014 = scalar_lea.sflag [#allocation3], 9
  %1015 = vsyncmov %s1014
  %s1016 = vpop.sfrf %1015
  %p1017 = scmp.eq.s32.totalorder %s1016, 0
  %p1018 = pneg %p1017
  %1020 = shalt.err (%p1018)
  %s1021 = scalar_lea.sflag [#allocation3], 10
  %1022 = vsyncmov %s1021
  %s1023 = vpop.sfrf %1022
  %p1024 = scmp.eq.s32.totalorder %s1023, 0
  %p1025 = pneg %p1024
  %1027 = shalt.err (%p1025)
  %s1028 = scalar_lea.sflag [#allocation3], 11
  %1029 = vsyncmov %s1028
  %s1030 = vpop.sfrf %1029
  %p1031 = scmp.eq.s32.totalorder %s1030, 0
  %p1032 = pneg %p1031
  %1034 = shalt.err (%p1032)
  %s1035 = scalar_lea.sflag [#allocation3], 12
  %1036 = vsyncmov %s1035
  %s1037 = vpop.sfrf %1036
  %p1038 = scmp.eq.s32.totalorder %s1037, 0
  %p1039 = pneg %p1038
  %1041 = shalt.err (%p1039)
  %s1042 = scalar_lea.sflag [#allocation3], 13
  %1043 = vsyncmov %s1042
  %s1044 = vpop.sfrf %1043
  %p1045 = scmp.eq.s32.totalorder %s1044, 0
  %p1046 = pneg %p1045
  %1048 = shalt.err (%p1046)
  %s1049 = scalar_lea.sflag [#allocation3], 14
  %1050 = vsyncmov %s1049
  %s1051 = vpop.sfrf %1050
  %p1052 = scmp.eq.s32.totalorder %s1051, 0
  %p1053 = pneg %p1052
  %1055 = shalt.err (%p1053)
  %s1056 = scalar_lea.sflag [#allocation3], 15
  %1057 = vsyncmov %s1056
  %s1058 = vpop.sfrf %1057
  %p1059 = scmp.eq.s32.totalorder %s1058, 0
  %p1060 = pneg %p1059
  %1062 = shalt.err (%p1060)

</llo_original>
